<compile_context>
chip_gen: v6e
topology: v6e:2x2x1
jax: 0.10.0
libtpu: 0.0.40
codegen_flags: <defaults>
</compile_context>

<pallas_src>
import jax
import jax.numpy as jnp
from jax import lax
from jax.experimental import pallas as pl
from jax.experimental.pallas import tpu as pltpu


# -----------------------------------------------------------------------------
# Fused Pallas kernel (all LSTM layers + FC head, wavefront schedule)
# -----------------------------------------------------------------------------
def make_lstm_network_kernel(num_layers, hidden_dim, seq_len, batch):
    L, H, T, B = num_layers, hidden_dim, seq_len, batch

    def gate_math(gates, c):
        # PyTorch gate order: [input, forget, cell(g), output]; gates is (B, 4H) f32.
        i_g = jax.nn.sigmoid(gates[:, 0 * H:1 * H])
        f_g = jax.nn.sigmoid(gates[:, 1 * H:2 * H])
        g_g = jnp.tanh(gates[:, 2 * H:3 * H])
        o_g = jax.nn.sigmoid(gates[:, 3 * H:4 * H])
        c_new = f_g * c + i_g * g_g
        h_new = o_g * jnp.tanh(c_new)
        return h_new, c_new

    def kernel(*refs):
        x_ref = refs[0]                                        # (T*B, I) bf16, time-major
        layer_refs = [refs[1 + 3 * l: 4 + 3 * l] for l in range(L)]
        fc_w_ref = refs[1 + 3 * L]                             # (H, O)  bf16
        fc_b_ref = refs[2 + 3 * L]                             # (1, O)  f32
        out_ref = refs[3 + 3 * L]                              # (B, O)  f32

        w_ih = [layer_refs[l][0][...] for l in range(L)]       # (in, 4H) bf16
        w_hh = [layer_refs[l][1][...] for l in range(L)]       # (H, 4H)  bf16
        bias = [layer_refs[l][2][...] for l in range(L)]       # (1, 4H)  f32

        # Layer-0 input projection (+ bias) hoisted over all timesteps: one
        # big MXU matmul off the recurrence.  Result is time-major so each
        # per-step gate slab is a contiguous leading-dim slice.
        xp0 = (jnp.dot(x_ref[...], w_ih[0],
                       preferred_element_type=jnp.float32)
               + bias[0])                                      # (T*B, 4H) f32

        # h/c carried as values (vregs): no VMEM scratch, no ref barriers.
        h = [jnp.zeros((B, H), jnp.float32) for _ in range(L)]
        c = [jnp.zeros((B, H), jnp.float32) for _ in range(L)]

        # Wavefront: step s runs (layer l, timestep s-l) for all valid l.
        # Cells within a step are independent (layer l reads layer l-1's value
        # from the END of step s-1 via the snapshot below).
        for s in range(T + L - 1):
            h_prev = list(h)                                   # snapshot of step s-1
            for l in range(L):
                t = s - l
                if not (0 <= t < T):
                    continue
                h_rec = h_prev[l].astype(jnp.bfloat16)
                if l == 0:
                    gates = xp0[t * B:(t + 1) * B, :] + jnp.dot(
                        h_rec, w_hh[0], preferred_element_type=jnp.float32)
                else:
                    x_in = h_prev[l - 1].astype(jnp.bfloat16)  # layer l-1 @ timestep t
                    gates = (jnp.dot(x_in, w_ih[l],
                                     preferred_element_type=jnp.float32)
                             + jnp.dot(h_rec, w_hh[l],
                                       preferred_element_type=jnp.float32)
                             + bias[l])
                h[l], c[l] = gate_math(gates, c[l])

        # FC head on the last layer's final-timestep hidden state.
        out_ref[...] = (jnp.dot(h[L - 1].astype(jnp.bfloat16), fc_w_ref[...],
                                preferred_element_type=jnp.float32)
                        + fc_b_ref[...])

    return kernel


# -----------------------------------------------------------------------------
# Wrapper
# -----------------------------------------------------------------------------
def lstm_network_forward(x_btf, layer_params, fc_w_t, fc_b, hidden_dim):
    """Full LSTMNetwork forward in a single fused Pallas call.

    x_btf: (B, T, input_dim) batch-first input (PyTorch convention).
    layer_params: list of (W_ih^T (in,4H), W_hh^T (H,4H), b_ih+b_hh (1,4H)).
    fc_w_t: (H, output_dim), fc_b: (1, output_dim).
    """
    B, T, I = x_btf.shape
    L = len(layer_params)
    H = hidden_dim
    O = fc_w_t.shape[1]

    # Time-major + flattened input, bf16 matmul operands (f32 accumulation is
    # requested inside the kernel).  These casts/transposes are cheap XLA
    # layout plumbing outside the Pallas critical path.
    x_tb = jnp.transpose(x_btf, (1, 0, 2)).reshape(T * B, I).astype(jnp.bfloat16)

    args = [x_tb]
    for (w_ih_t, w_hh_t, b) in layer_params:
        args += [w_ih_t.astype(jnp.bfloat16), w_hh_t.astype(jnp.bfloat16), b]
    args += [fc_w_t.astype(jnp.bfloat16), fc_b]

    kernel = make_lstm_network_kernel(L, H, T, B)
    vmem_spec = pl.BlockSpec(memory_space=pltpu.MemorySpace.VMEM)

    # No grid: the whole (tiny) problem is VMEM-resident; weights, input and
    # all intermediate hidden state never round-trip through HBM.
    return pl.pallas_call(
        kernel,
        out_shape=jax.ShapeDtypeStruct((B, O), jnp.float32),
        in_specs=[vmem_spec] * len(args),
        out_specs=vmem_spec,
        compiler_params=pltpu.CompilerParams(
            vmem_limit_bytes=32 * 1024 * 1024),   # explicit budget; safe on v5e/v6e/v7x
    )(*args)


# -----------------------------------------------------------------------------
# Pure-JAX reference (matches PyTorch nn.LSTM semantics), f32 throughout
# -----------------------------------------------------------------------------
def reference_forward(x_btf, layer_params, fc_w_t, fc_b, hidden_dim):
    B = x_btf.shape[0]
    h_seq = jnp.transpose(x_btf, (1, 0, 2))
    for (w_ih_t, w_hh_t, b) in layer_params:
        def step(carry, x_t):
            h, c = carry
            gates = x_t @ w_ih_t + h @ w_hh_t + b
            i_g, f_g, g_g, o_g = jnp.split(gates, 4, axis=-1)
            i_g = jax.nn.sigmoid(i_g)
            f_g = jax.nn.sigmoid(f_g)
            g_g = jnp.tanh(g_g)
            o_g = jax.nn.sigmoid(o_g)
            c_new = f_g * c + i_g * g_g
            h_new = o_g * jnp.tanh(c_new)
            return (h_new, c_new), h_new
        init = (jnp.zeros((B, hidden_dim), jnp.float32),
                jnp.zeros((B, hidden_dim), jnp.float32))
        _, h_seq = lax.scan(step, init, h_seq)
    return h_seq[-1] @ fc_w_t + fc_b


# -----------------------------------------------------------------------------
# Deterministic parameter construction (PyTorch-style uniform init)
# -----------------------------------------------------------------------------
def init_params(key, input_dim, hidden_dim, output_dim, num_layers):
    k = 1.0 / jnp.sqrt(hidden_dim)
    layer_params = []
    for layer in range(num_layers):
        in_dim = input_dim if layer == 0 else hidden_dim
        key, k1, k2, k3, k4 = jax.random.split(key, 5)
        w_ih = jax.random.uniform(k1, (4 * hidden_dim, in_dim), jnp.float32, -k, k)
        w_hh = jax.random.uniform(k2, (4 * hidden_dim, hidden_dim), jnp.float32, -k, k)
        b_ih = jax.random.uniform(k3, (4 * hidden_dim,), jnp.float32, -k, k)
        b_hh = jax.random.uniform(k4, (4 * hidden_dim,), jnp.float32, -k, k)
        layer_params.append(
            (w_ih.T, w_hh.T, (b_ih + b_hh).reshape(1, 4 * hidden_dim)))
    key, k5, k6 = jax.random.split(key, 3)
    kf = 1.0 / jnp.sqrt(hidden_dim)
    fc_w = jax.random.uniform(k5, (output_dim, hidden_dim), jnp.float32, -kf, kf)
    fc_b = jax.random.uniform(k6, (output_dim,), jnp.float32, -kf, kf)
    return layer_params, fc_w.T, fc_b.reshape(1, output_dim)


# -----------------------------------------------------------------------------
if __name__ == "__main__":
    B, T = 2, 8
    input_dim, hidden_dim, output_dim, num_layers = 16, 32, 4, 2

    root = jax.random.PRNGKey(0)
    kx, kp = jax.random.split(root)
    x = jax.random.normal(kx, (B, T, input_dim), dtype=jnp.float32)
    layer_params, fc_w_t, fc_b = init_params(
        kp, input_dim, hidden_dim, output_dim, num_layers)

    out = lstm_network_forward(x, layer_params, fc_w_t, fc_b, hidden_dim)
    out = jax.block_until_ready(out)

    ref = reference_forward(x, layer_params, fc_w_t, fc_b, hidden_dim)
    assert out.shape == (B, output_dim)
    # Tolerance loosened vs. the pure-f32 version: matmul operands are bf16
    # (f32 accumulation), per the perf review.
    assert jnp.allclose(out, ref, atol=5e-2, rtol=5e-2), (out, ref)

    print("KERNEL_OK")
</pallas_src>

<mosaic_0001>
module attributes {stable_mosaic.version = 11 : i64} {
  func.func @kernel(%arg0: memref<16x16xbf16, #tpu.memory_space<vmem>>, %arg1: memref<16x128xbf16, #tpu.memory_space<vmem>>, %arg2: memref<32x128xbf16, #tpu.memory_space<vmem>>, %arg3: memref<1x128xf32, #tpu.memory_space<vmem>>, %arg4: memref<32x128xbf16, #tpu.memory_space<vmem>>, %arg5: memref<32x128xbf16, #tpu.memory_space<vmem>>, %arg6: memref<1x128xf32, #tpu.memory_space<vmem>>, %arg7: memref<32x4xbf16, #tpu.memory_space<vmem>>, %arg8: memref<1x4xf32, #tpu.memory_space<vmem>>, %arg9: memref<2x4xf32, #tpu.memory_space<vmem>>) attributes {dimension_semantics = [], scalar_prefetch = 0 : i64, scratch_operands = 0 : i64, tpu.core_type = #tpu.core_type<tc>} {
    %c0 = arith.constant 0 : index
    %c0_0 = arith.constant 0 : index
    %0 = vector.load %arg1[%c0, %c0_0] : memref<16x128xbf16, #tpu.memory_space<vmem>>, vector<16x128xbf16>
    %c0_1 = arith.constant 0 : index
    %c0_2 = arith.constant 0 : index
    %1 = vector.load %arg4[%c0_1, %c0_2] : memref<32x128xbf16, #tpu.memory_space<vmem>>, vector<32x128xbf16>
    %c0_3 = arith.constant 0 : index
    %c0_4 = arith.constant 0 : index
    %2 = vector.load %arg2[%c0_3, %c0_4] : memref<32x128xbf16, #tpu.memory_space<vmem>>, vector<32x128xbf16>
    %c0_5 = arith.constant 0 : index
    %c0_6 = arith.constant 0 : index
    %3 = vector.load %arg5[%c0_5, %c0_6] : memref<32x128xbf16, #tpu.memory_space<vmem>>, vector<32x128xbf16>
    %c0_7 = arith.constant 0 : index
    %c0_8 = arith.constant 0 : index
    %4 = vector.load %arg3[%c0_7, %c0_8] : memref<1x128xf32, #tpu.memory_space<vmem>>, vector<1x128xf32>
    %c0_9 = arith.constant 0 : index
    %c0_10 = arith.constant 0 : index
    %5 = vector.load %arg6[%c0_9, %c0_10] : memref<1x128xf32, #tpu.memory_space<vmem>>, vector<1x128xf32>
    %c0_11 = arith.constant 0 : index
    %c0_12 = arith.constant 0 : index
    %6 = vector.load %arg0[%c0_11, %c0_12] : memref<16x16xbf16, #tpu.memory_space<vmem>>, vector<16x16xbf16>
    %cst = arith.constant dense<0.000000e+00> : vector<16x128xf32>
    %7 = tpu.matmul %6, %0, %cst {dimension_numbers = #tpu.dot_dimension_numbers<[1], [0], [0], [1], [0, 0, 1, 1], [], []>} : vector<16x16xbf16>, vector<16x128xbf16>, vector<16x128xf32> -> vector<16x128xf32>
    %8 = vector.broadcast %4 : vector<1x128xf32> to vector<16x128xf32>
    %9 = arith.addf %7, %8 : vector<16x128xf32>
    %cst_13 = arith.constant 0.000000e+00 : f32
    %10 = vector.broadcast %cst_13 : f32 to vector<2x32xf32>
    %cst_14 = arith.constant 0.000000e+00 : f32
    %11 = vector.broadcast %cst_14 : f32 to vector<2x32xf32>
    %cst_15 = arith.constant 0.000000e+00 : f32
    %12 = vector.broadcast %cst_15 : f32 to vector<2x32xf32>
    %cst_16 = arith.constant 0.000000e+00 : f32
    %13 = vector.broadcast %cst_16 : f32 to vector<2x32xf32>
    %14 = arith.truncf %10 : vector<2x32xf32> to vector<2x32xbf16>
    %15 = vector.extract_strided_slice %9 {offsets = [0, 0], sizes = [2, 128], strides = [1, 1]} : vector<16x128xf32> to vector<2x128xf32>
    %cst_17 = arith.constant dense<0.000000e+00> : vector<2x128xf32>
    %16 = tpu.matmul %14, %2, %cst_17 {dimension_numbers = #tpu.dot_dimension_numbers<[1], [0], [0], [1], [0, 0, 1, 1], [], []>} : vector<2x32xbf16>, vector<32x128xbf16>, vector<2x128xf32> -> vector<2x128xf32>
    %17 = arith.addf %15, %16 : vector<2x128xf32>
    %18 = vector.extract_strided_slice %17 {offsets = [0, 0], sizes = [2, 32], strides = [1, 1]} : vector<2x128xf32> to vector<2x32xf32>
    %19 = arith.negf %18 : vector<2x32xf32>
    %20 = math.exp %19 : vector<2x32xf32>
    %cst_18 = arith.constant 1.000000e+00 : f32
    %21 = vector.broadcast %cst_18 : f32 to vector<2x32xf32>
    %22 = arith.addf %21, %20 : vector<2x32xf32>
    %23 = arith.divf %21, %22 : vector<2x32xf32>
    %24 = vector.extract_strided_slice %17 {offsets = [0, 32], sizes = [2, 32], strides = [1, 1]} : vector<2x128xf32> to vector<2x32xf32>
    %25 = arith.negf %24 : vector<2x32xf32>
    %26 = math.exp %25 : vector<2x32xf32>
    %cst_19 = arith.constant 1.000000e+00 : f32
    %27 = vector.broadcast %cst_19 : f32 to vector<2x32xf32>
    %28 = arith.addf %27, %26 : vector<2x32xf32>
    %29 = arith.divf %27, %28 : vector<2x32xf32>
    %30 = vector.extract_strided_slice %17 {offsets = [0, 64], sizes = [2, 32], strides = [1, 1]} : vector<2x128xf32> to vector<2x32xf32>
    %31 = math.tanh %30 : vector<2x32xf32>
    %32 = vector.extract_strided_slice %17 {offsets = [0, 96], sizes = [2, 32], strides = [1, 1]} : vector<2x128xf32> to vector<2x32xf32>
    %33 = arith.negf %32 : vector<2x32xf32>
    %34 = math.exp %33 : vector<2x32xf32>
    %cst_20 = arith.constant 1.000000e+00 : f32
    %35 = vector.broadcast %cst_20 : f32 to vector<2x32xf32>
    %36 = arith.addf %35, %34 : vector<2x32xf32>
    %37 = arith.divf %35, %36 : vector<2x32xf32>
    %38 = arith.mulf %29, %12 : vector<2x32xf32>
    %39 = arith.mulf %23, %31 : vector<2x32xf32>
    %40 = arith.addf %38, %39 : vector<2x32xf32>
    %41 = math.tanh %40 : vector<2x32xf32>
    %42 = arith.mulf %37, %41 : vector<2x32xf32>
    %43 = arith.truncf %42 : vector<2x32xf32> to vector<2x32xbf16>
    %44 = vector.extract_strided_slice %9 {offsets = [2, 0], sizes = [2, 128], strides = [1, 1]} : vector<16x128xf32> to vector<2x128xf32>
    %cst_21 = arith.constant dense<0.000000e+00> : vector<2x128xf32>
    %45 = tpu.matmul %43, %2, %cst_21 {dimension_numbers = #tpu.dot_dimension_numbers<[1], [0], [0], [1], [0, 0, 1, 1], [], []>} : vector<2x32xbf16>, vector<32x128xbf16>, vector<2x128xf32> -> vector<2x128xf32>
    %46 = arith.addf %44, %45 : vector<2x128xf32>
    %47 = vector.extract_strided_slice %46 {offsets = [0, 0], sizes = [2, 32], strides = [1, 1]} : vector<2x128xf32> to vector<2x32xf32>
    %48 = arith.negf %47 : vector<2x32xf32>
    %49 = math.exp %48 : vector<2x32xf32>
    %cst_22 = arith.constant 1.000000e+00 : f32
    %50 = vector.broadcast %cst_22 : f32 to vector<2x32xf32>
    %51 = arith.addf %50, %49 : vector<2x32xf32>
    %52 = arith.divf %50, %51 : vector<2x32xf32>
    %53 = vector.extract_strided_slice %46 {offsets = [0, 32], sizes = [2, 32], strides = [1, 1]} : vector<2x128xf32> to vector<2x32xf32>
    %54 = arith.negf %53 : vector<2x32xf32>
    %55 = math.exp %54 : vector<2x32xf32>
    %cst_23 = arith.constant 1.000000e+00 : f32
    %56 = vector.broadcast %cst_23 : f32 to vector<2x32xf32>
    %57 = arith.addf %56, %55 : vector<2x32xf32>
    %58 = arith.divf %56, %57 : vector<2x32xf32>
    %59 = vector.extract_strided_slice %46 {offsets = [0, 64], sizes = [2, 32], strides = [1, 1]} : vector<2x128xf32> to vector<2x32xf32>
    %60 = math.tanh %59 : vector<2x32xf32>
    %61 = vector.extract_strided_slice %46 {offsets = [0, 96], sizes = [2, 32], strides = [1, 1]} : vector<2x128xf32> to vector<2x32xf32>
    %62 = arith.negf %61 : vector<2x32xf32>
    %63 = math.exp %62 : vector<2x32xf32>
    %cst_24 = arith.constant 1.000000e+00 : f32
    %64 = vector.broadcast %cst_24 : f32 to vector<2x32xf32>
    %65 = arith.addf %64, %63 : vector<2x32xf32>
    %66 = arith.divf %64, %65 : vector<2x32xf32>
    %67 = arith.mulf %58, %40 : vector<2x32xf32>
    %68 = arith.mulf %52, %60 : vector<2x32xf32>
    %69 = arith.addf %67, %68 : vector<2x32xf32>
    %70 = math.tanh %69 : vector<2x32xf32>
    %71 = arith.mulf %66, %70 : vector<2x32xf32>
    %72 = arith.truncf %11 : vector<2x32xf32> to vector<2x32xbf16>
    %73 = arith.truncf %42 : vector<2x32xf32> to vector<2x32xbf16>
    %cst_25 = arith.constant dense<0.000000e+00> : vector<2x128xf32>
    %74 = tpu.matmul %73, %1, %cst_25 {dimension_numbers = #tpu.dot_dimension_numbers<[1], [0], [0], [1], [0, 0, 1, 1], [], []>} : vector<2x32xbf16>, vector<32x128xbf16>, vector<2x128xf32> -> vector<2x128xf32>
    %cst_26 = arith.constant dense<0.000000e+00> : vector<2x128xf32>
    %75 = tpu.matmul %72, %3, %cst_26 {dimension_numbers = #tpu.dot_dimension_numbers<[1], [0], [0], [1], [0, 0, 1, 1], [], []>} : vector<2x32xbf16>, vector<32x128xbf16>, vector<2x128xf32> -> vector<2x128xf32>
    %76 = arith.addf %74, %75 : vector<2x128xf32>
    %77 = vector.broadcast %5 : vector<1x128xf32> to vector<2x128xf32>
    %78 = arith.addf %76, %77 : vector<2x128xf32>
    %79 = vector.extract_strided_slice %78 {offsets = [0, 0], sizes = [2, 32], strides = [1, 1]} : vector<2x128xf32> to vector<2x32xf32>
    %80 = arith.negf %79 : vector<2x32xf32>
    %81 = math.exp %80 : vector<2x32xf32>
    %cst_27 = arith.constant 1.000000e+00 : f32
    %82 = vector.broadcast %cst_27 : f32 to vector<2x32xf32>
    %83 = arith.addf %82, %81 : vector<2x32xf32>
    %84 = arith.divf %82, %83 : vector<2x32xf32>
    %85 = vector.extract_strided_slice %78 {offsets = [0, 32], sizes = [2, 32], strides = [1, 1]} : vector<2x128xf32> to vector<2x32xf32>
    %86 = arith.negf %85 : vector<2x32xf32>
    %87 = math.exp %86 : vector<2x32xf32>
    %cst_28 = arith.constant 1.000000e+00 : f32
    %88 = vector.broadcast %cst_28 : f32 to vector<2x32xf32>
    %89 = arith.addf %88, %87 : vector<2x32xf32>
    %90 = arith.divf %88, %89 : vector<2x32xf32>
    %91 = vector.extract_strided_slice %78 {offsets = [0, 64], sizes = [2, 32], strides = [1, 1]} : vector<2x128xf32> to vector<2x32xf32>
    %92 = math.tanh %91 : vector<2x32xf32>
    %93 = vector.extract_strided_slice %78 {offsets = [0, 96], sizes = [2, 32], strides = [1, 1]} : vector<2x128xf32> to vector<2x32xf32>
    %94 = arith.negf %93 : vector<2x32xf32>
    %95 = math.exp %94 : vector<2x32xf32>
    %cst_29 = arith.constant 1.000000e+00 : f32
    %96 = vector.broadcast %cst_29 : f32 to vector<2x32xf32>
    %97 = arith.addf %96, %95 : vector<2x32xf32>
    %98 = arith.divf %96, %97 : vector<2x32xf32>
    %99 = arith.mulf %90, %13 : vector<2x32xf32>
    %100 = arith.mulf %84, %92 : vector<2x32xf32>
    %101 = arith.addf %99, %100 : vector<2x32xf32>
    %102 = math.tanh %101 : vector<2x32xf32>
    %103 = arith.mulf %98, %102 : vector<2x32xf32>
    %104 = arith.truncf %71 : vector<2x32xf32> to vector<2x32xbf16>
    %105 = vector.extract_strided_slice %9 {offsets = [4, 0], sizes = [2, 128], strides = [1, 1]} : vector<16x128xf32> to vector<2x128xf32>
    %cst_30 = arith.constant dense<0.000000e+00> : vector<2x128xf32>
    %106 = tpu.matmul %104, %2, %cst_30 {dimension_numbers = #tpu.dot_dimension_numbers<[1], [0], [0], [1], [0, 0, 1, 1], [], []>} : vector<2x32xbf16>, vector<32x128xbf16>, vector<2x128xf32> -> vector<2x128xf32>
    %107 = arith.addf %105, %106 : vector<2x128xf32>
    %108 = vector.extract_strided_slice %107 {offsets = [0, 0], sizes = [2, 32], strides = [1, 1]} : vector<2x128xf32> to vector<2x32xf32>
    %109 = arith.negf %108 : vector<2x32xf32>
    %110 = math.exp %109 : vector<2x32xf32>
    %cst_31 = arith.constant 1.000000e+00 : f32
    %111 = vector.broadcast %cst_31 : f32 to vector<2x32xf32>
    %112 = arith.addf %111, %110 : vector<2x32xf32>
    %113 = arith.divf %111, %112 : vector<2x32xf32>
    %114 = vector.extract_strided_slice %107 {offsets = [0, 32], sizes = [2, 32], strides = [1, 1]} : vector<2x128xf32> to vector<2x32xf32>
    %115 = arith.negf %114 : vector<2x32xf32>
    %116 = math.exp %115 : vector<2x32xf32>
    %cst_32 = arith.constant 1.000000e+00 : f32
    %117 = vector.broadcast %cst_32 : f32 to vector<2x32xf32>
    %118 = arith.addf %117, %116 : vector<2x32xf32>
    %119 = arith.divf %117, %118 : vector<2x32xf32>
    %120 = vector.extract_strided_slice %107 {offsets = [0, 64], sizes = [2, 32], strides = [1, 1]} : vector<2x128xf32> to vector<2x32xf32>
    %121 = math.tanh %120 : vector<2x32xf32>
    %122 = vector.extract_strided_slice %107 {offsets = [0, 96], sizes = [2, 32], strides = [1, 1]} : vector<2x128xf32> to vector<2x32xf32>
    %123 = arith.negf %122 : vector<2x32xf32>
    %124 = math.exp %123 : vector<2x32xf32>
    %cst_33 = arith.constant 1.000000e+00 : f32
    %125 = vector.broadcast %cst_33 : f32 to vector<2x32xf32>
    %126 = arith.addf %125, %124 : vector<2x32xf32>
    %127 = arith.divf %125, %126 : vector<2x32xf32>
    %128 = arith.mulf %119, %69 : vector<2x32xf32>
    %129 = arith.mulf %113, %121 : vector<2x32xf32>
    %130 = arith.addf %128, %129 : vector<2x32xf32>
    %131 = math.tanh %130 : vector<2x32xf32>
    %132 = arith.mulf %127, %131 : vector<2x32xf32>
    %133 = arith.truncf %103 : vector<2x32xf32> to vector<2x32xbf16>
    %134 = arith.truncf %71 : vector<2x32xf32> to vector<2x32xbf16>
    %cst_34 = arith.constant dense<0.000000e+00> : vector<2x128xf32>
    %135 = tpu.matmul %134, %1, %cst_34 {dimension_numbers = #tpu.dot_dimension_numbers<[1], [0], [0], [1], [0, 0, 1, 1], [], []>} : vector<2x32xbf16>, vector<32x128xbf16>, vector<2x128xf32> -> vector<2x128xf32>
    %cst_35 = arith.constant dense<0.000000e+00> : vector<2x128xf32>
    %136 = tpu.matmul %133, %3, %cst_35 {dimension_numbers = #tpu.dot_dimension_numbers<[1], [0], [0], [1], [0, 0, 1, 1], [], []>} : vector<2x32xbf16>, vector<32x128xbf16>, vector<2x128xf32> -> vector<2x128xf32>
    %137 = arith.addf %135, %136 : vector<2x128xf32>
    %138 = vector.broadcast %5 : vector<1x128xf32> to vector<2x128xf32>
    %139 = arith.addf %137, %138 : vector<2x128xf32>
    %140 = vector.extract_strided_slice %139 {offsets = [0, 0], sizes = [2, 32], strides = [1, 1]} : vector<2x128xf32> to vector<2x32xf32>
    %141 = arith.negf %140 : vector<2x32xf32>
    %142 = math.exp %141 : vector<2x32xf32>
    %cst_36 = arith.constant 1.000000e+00 : f32
    %143 = vector.broadcast %cst_36 : f32 to vector<2x32xf32>
    %144 = arith.addf %143, %142 : vector<2x32xf32>
    %145 = arith.divf %143, %144 : vector<2x32xf32>
    %146 = vector.extract_strided_slice %139 {offsets = [0, 32], sizes = [2, 32], strides = [1, 1]} : vector<2x128xf32> to vector<2x32xf32>
    %147 = arith.negf %146 : vector<2x32xf32>
    %148 = math.exp %147 : vector<2x32xf32>
    %cst_37 = arith.constant 1.000000e+00 : f32
    %149 = vector.broadcast %cst_37 : f32 to vector<2x32xf32>
    %150 = arith.addf %149, %148 : vector<2x32xf32>
    %151 = arith.divf %149, %150 : vector<2x32xf32>
    %152 = vector.extract_strided_slice %139 {offsets = [0, 64], sizes = [2, 32], strides = [1, 1]} : vector<2x128xf32> to vector<2x32xf32>
    %153 = math.tanh %152 : vector<2x32xf32>
    %154 = vector.extract_strided_slice %139 {offsets = [0, 96], sizes = [2, 32], strides = [1, 1]} : vector<2x128xf32> to vector<2x32xf32>
    %155 = arith.negf %154 : vector<2x32xf32>
    %156 = math.exp %155 : vector<2x32xf32>
    %cst_38 = arith.constant 1.000000e+00 : f32
    %157 = vector.broadcast %cst_38 : f32 to vector<2x32xf32>
    %158 = arith.addf %157, %156 : vector<2x32xf32>
    %159 = arith.divf %157, %158 : vector<2x32xf32>
    %160 = arith.mulf %151, %101 : vector<2x32xf32>
    %161 = arith.mulf %145, %153 : vector<2x32xf32>
    %162 = arith.addf %160, %161 : vector<2x32xf32>
    %163 = math.tanh %162 : vector<2x32xf32>
    %164 = arith.mulf %159, %163 : vector<2x32xf32>
    %165 = arith.truncf %132 : vector<2x32xf32> to vector<2x32xbf16>
    %166 = vector.extract_strided_slice %9 {offsets = [6, 0], sizes = [2, 128], strides = [1, 1]} : vector<16x128xf32> to vector<2x128xf32>
    %cst_39 = arith.constant dense<0.000000e+00> : vector<2x128xf32>
    %167 = tpu.matmul %165, %2, %cst_39 {dimension_numbers = #tpu.dot_dimension_numbers<[1], [0], [0], [1], [0, 0, 1, 1], [], []>} : vector<2x32xbf16>, vector<32x128xbf16>, vector<2x128xf32> -> vector<2x128xf32>
    %168 = arith.addf %166, %167 : vector<2x128xf32>
    %169 = vector.extract_strided_slice %168 {offsets = [0, 0], sizes = [2, 32], strides = [1, 1]} : vector<2x128xf32> to vector<2x32xf32>
    %170 = arith.negf %169 : vector<2x32xf32>
    %171 = math.exp %170 : vector<2x32xf32>
    %cst_40 = arith.constant 1.000000e+00 : f32
    %172 = vector.broadcast %cst_40 : f32 to vector<2x32xf32>
    %173 = arith.addf %172, %171 : vector<2x32xf32>
    %174 = arith.divf %172, %173 : vector<2x32xf32>
    %175 = vector.extract_strided_slice %168 {offsets = [0, 32], sizes = [2, 32], strides = [1, 1]} : vector<2x128xf32> to vector<2x32xf32>
    %176 = arith.negf %175 : vector<2x32xf32>
    %177 = math.exp %176 : vector<2x32xf32>
    %cst_41 = arith.constant 1.000000e+00 : f32
    %178 = vector.broadcast %cst_41 : f32 to vector<2x32xf32>
    %179 = arith.addf %178, %177 : vector<2x32xf32>
    %180 = arith.divf %178, %179 : vector<2x32xf32>
    %181 = vector.extract_strided_slice %168 {offsets = [0, 64], sizes = [2, 32], strides = [1, 1]} : vector<2x128xf32> to vector<2x32xf32>
    %182 = math.tanh %181 : vector<2x32xf32>
    %183 = vector.extract_strided_slice %168 {offsets = [0, 96], sizes = [2, 32], strides = [1, 1]} : vector<2x128xf32> to vector<2x32xf32>
    %184 = arith.negf %183 : vector<2x32xf32>
    %185 = math.exp %184 : vector<2x32xf32>
    %cst_42 = arith.constant 1.000000e+00 : f32
    %186 = vector.broadcast %cst_42 : f32 to vector<2x32xf32>
    %187 = arith.addf %186, %185 : vector<2x32xf32>
    %188 = arith.divf %186, %187 : vector<2x32xf32>
    %189 = arith.mulf %180, %130 : vector<2x32xf32>
    %190 = arith.mulf %174, %182 : vector<2x32xf32>
    %191 = arith.addf %189, %190 : vector<2x32xf32>
    %192 = math.tanh %191 : vector<2x32xf32>
    %193 = arith.mulf %188, %192 : vector<2x32xf32>
    %194 = arith.truncf %164 : vector<2x32xf32> to vector<2x32xbf16>
    %195 = arith.truncf %132 : vector<2x32xf32> to vector<2x32xbf16>
    %cst_43 = arith.constant dense<0.000000e+00> : vector<2x128xf32>
    %196 = tpu.matmul %195, %1, %cst_43 {dimension_numbers = #tpu.dot_dimension_numbers<[1], [0], [0], [1], [0, 0, 1, 1], [], []>} : vector<2x32xbf16>, vector<32x128xbf16>, vector<2x128xf32> -> vector<2x128xf32>
    %cst_44 = arith.constant dense<0.000000e+00> : vector<2x128xf32>
    %197 = tpu.matmul %194, %3, %cst_44 {dimension_numbers = #tpu.dot_dimension_numbers<[1], [0], [0], [1], [0, 0, 1, 1], [], []>} : vector<2x32xbf16>, vector<32x128xbf16>, vector<2x128xf32> -> vector<2x128xf32>
    %198 = arith.addf %196, %197 : vector<2x128xf32>
    %199 = vector.broadcast %5 : vector<1x128xf32> to vector<2x128xf32>
    %200 = arith.addf %198, %199 : vector<2x128xf32>
    %201 = vector.extract_strided_slice %200 {offsets = [0, 0], sizes = [2, 32], strides = [1, 1]} : vector<2x128xf32> to vector<2x32xf32>
    %202 = arith.negf %201 : vector<2x32xf32>
    %203 = math.exp %202 : vector<2x32xf32>
    %cst_45 = arith.constant 1.000000e+00 : f32
    %204 = vector.broadcast %cst_45 : f32 to vector<2x32xf32>
    %205 = arith.addf %204, %203 : vector<2x32xf32>
    %206 = arith.divf %204, %205 : vector<2x32xf32>
    %207 = vector.extract_strided_slice %200 {offsets = [0, 32], sizes = [2, 32], strides = [1, 1]} : vector<2x128xf32> to vector<2x32xf32>
    %208 = arith.negf %207 : vector<2x32xf32>
    %209 = math.exp %208 : vector<2x32xf32>
    %cst_46 = arith.constant 1.000000e+00 : f32
    %210 = vector.broadcast %cst_46 : f32 to vector<2x32xf32>
    %211 = arith.addf %210, %209 : vector<2x32xf32>
    %212 = arith.divf %210, %211 : vector<2x32xf32>
    %213 = vector.extract_strided_slice %200 {offsets = [0, 64], sizes = [2, 32], strides = [1, 1]} : vector<2x128xf32> to vector<2x32xf32>
    %214 = math.tanh %213 : vector<2x32xf32>
    %215 = vector.extract_strided_slice %200 {offsets = [0, 96], sizes = [2, 32], strides = [1, 1]} : vector<2x128xf32> to vector<2x32xf32>
    %216 = arith.negf %215 : vector<2x32xf32>
    %217 = math.exp %216 : vector<2x32xf32>
    %cst_47 = arith.constant 1.000000e+00 : f32
    %218 = vector.broadcast %cst_47 : f32 to vector<2x32xf32>
    %219 = arith.addf %218, %217 : vector<2x32xf32>
    %220 = arith.divf %218, %219 : vector<2x32xf32>
    %221 = arith.mulf %212, %162 : vector<2x32xf32>
    %222 = arith.mulf %206, %214 : vector<2x32xf32>
    %223 = arith.addf %221, %222 : vector<2x32xf32>
    %224 = math.tanh %223 : vector<2x32xf32>
    %225 = arith.mulf %220, %224 : vector<2x32xf32>
    %226 = arith.truncf %193 : vector<2x32xf32> to vector<2x32xbf16>
    %227 = vector.extract_strided_slice %9 {offsets = [8, 0], sizes = [2, 128], strides = [1, 1]} : vector<16x128xf32> to vector<2x128xf32>
    %cst_48 = arith.constant dense<0.000000e+00> : vector<2x128xf32>
    %228 = tpu.matmul %226, %2, %cst_48 {dimension_numbers = #tpu.dot_dimension_numbers<[1], [0], [0], [1], [0, 0, 1, 1], [], []>} : vector<2x32xbf16>, vector<32x128xbf16>, vector<2x128xf32> -> vector<2x128xf32>
    %229 = arith.addf %227, %228 : vector<2x128xf32>
    %230 = vector.extract_strided_slice %229 {offsets = [0, 0], sizes = [2, 32], strides = [1, 1]} : vector<2x128xf32> to vector<2x32xf32>
    %231 = arith.negf %230 : vector<2x32xf32>
    %232 = math.exp %231 : vector<2x32xf32>
    %cst_49 = arith.constant 1.000000e+00 : f32
    %233 = vector.broadcast %cst_49 : f32 to vector<2x32xf32>
    %234 = arith.addf %233, %232 : vector<2x32xf32>
    %235 = arith.divf %233, %234 : vector<2x32xf32>
    %236 = vector.extract_strided_slice %229 {offsets = [0, 32], sizes = [2, 32], strides = [1, 1]} : vector<2x128xf32> to vector<2x32xf32>
    %237 = arith.negf %236 : vector<2x32xf32>
    %238 = math.exp %237 : vector<2x32xf32>
    %cst_50 = arith.constant 1.000000e+00 : f32
    %239 = vector.broadcast %cst_50 : f32 to vector<2x32xf32>
    %240 = arith.addf %239, %238 : vector<2x32xf32>
    %241 = arith.divf %239, %240 : vector<2x32xf32>
    %242 = vector.extract_strided_slice %229 {offsets = [0, 64], sizes = [2, 32], strides = [1, 1]} : vector<2x128xf32> to vector<2x32xf32>
    %243 = math.tanh %242 : vector<2x32xf32>
    %244 = vector.extract_strided_slice %229 {offsets = [0, 96], sizes = [2, 32], strides = [1, 1]} : vector<2x128xf32> to vector<2x32xf32>
    %245 = arith.negf %244 : vector<2x32xf32>
    %246 = math.exp %245 : vector<2x32xf32>
    %cst_51 = arith.constant 1.000000e+00 : f32
    %247 = vector.broadcast %cst_51 : f32 to vector<2x32xf32>
    %248 = arith.addf %247, %246 : vector<2x32xf32>
    %249 = arith.divf %247, %248 : vector<2x32xf32>
    %250 = arith.mulf %241, %191 : vector<2x32xf32>
    %251 = arith.mulf %235, %243 : vector<2x32xf32>
    %252 = arith.addf %250, %251 : vector<2x32xf32>
    %253 = math.tanh %252 : vector<2x32xf32>
    %254 = arith.mulf %249, %253 : vector<2x32xf32>
    %255 = arith.truncf %225 : vector<2x32xf32> to vector<2x32xbf16>
    %256 = arith.truncf %193 : vector<2x32xf32> to vector<2x32xbf16>
    %cst_52 = arith.constant dense<0.000000e+00> : vector<2x128xf32>
    %257 = tpu.matmul %256, %1, %cst_52 {dimension_numbers = #tpu.dot_dimension_numbers<[1], [0], [0], [1], [0, 0, 1, 1], [], []>} : vector<2x32xbf16>, vector<32x128xbf16>, vector<2x128xf32> -> vector<2x128xf32>
    %cst_53 = arith.constant dense<0.000000e+00> : vector<2x128xf32>
    %258 = tpu.matmul %255, %3, %cst_53 {dimension_numbers = #tpu.dot_dimension_numbers<[1], [0], [0], [1], [0, 0, 1, 1], [], []>} : vector<2x32xbf16>, vector<32x128xbf16>, vector<2x128xf32> -> vector<2x128xf32>
    %259 = arith.addf %257, %258 : vector<2x128xf32>
    %260 = vector.broadcast %5 : vector<1x128xf32> to vector<2x128xf32>
    %261 = arith.addf %259, %260 : vector<2x128xf32>
    %262 = vector.extract_strided_slice %261 {offsets = [0, 0], sizes = [2, 32], strides = [1, 1]} : vector<2x128xf32> to vector<2x32xf32>
    %263 = arith.negf %262 : vector<2x32xf32>
    %264 = math.exp %263 : vector<2x32xf32>
    %cst_54 = arith.constant 1.000000e+00 : f32
    %265 = vector.broadcast %cst_54 : f32 to vector<2x32xf32>
    %266 = arith.addf %265, %264 : vector<2x32xf32>
    %267 = arith.divf %265, %266 : vector<2x32xf32>
    %268 = vector.extract_strided_slice %261 {offsets = [0, 32], sizes = [2, 32], strides = [1, 1]} : vector<2x128xf32> to vector<2x32xf32>
    %269 = arith.negf %268 : vector<2x32xf32>
    %270 = math.exp %269 : vector<2x32xf32>
    %cst_55 = arith.constant 1.000000e+00 : f32
    %271 = vector.broadcast %cst_55 : f32 to vector<2x32xf32>
    %272 = arith.addf %271, %270 : vector<2x32xf32>
    %273 = arith.divf %271, %272 : vector<2x32xf32>
    %274 = vector.extract_strided_slice %261 {offsets = [0, 64], sizes = [2, 32], strides = [1, 1]} : vector<2x128xf32> to vector<2x32xf32>
    %275 = math.tanh %274 : vector<2x32xf32>
    %276 = vector.extract_strided_slice %261 {offsets = [0, 96], sizes = [2, 32], strides = [1, 1]} : vector<2x128xf32> to vector<2x32xf32>
    %277 = arith.negf %276 : vector<2x32xf32>
    %278 = math.exp %277 : vector<2x32xf32>
    %cst_56 = arith.constant 1.000000e+00 : f32
    %279 = vector.broadcast %cst_56 : f32 to vector<2x32xf32>
    %280 = arith.addf %279, %278 : vector<2x32xf32>
    %281 = arith.divf %279, %280 : vector<2x32xf32>
    %282 = arith.mulf %273, %223 : vector<2x32xf32>
    %283 = arith.mulf %267, %275 : vector<2x32xf32>
    %284 = arith.addf %282, %283 : vector<2x32xf32>
    %285 = math.tanh %284 : vector<2x32xf32>
    %286 = arith.mulf %281, %285 : vector<2x32xf32>
    %287 = arith.truncf %254 : vector<2x32xf32> to vector<2x32xbf16>
    %288 = vector.extract_strided_slice %9 {offsets = [10, 0], sizes = [2, 128], strides = [1, 1]} : vector<16x128xf32> to vector<2x128xf32>
    %cst_57 = arith.constant dense<0.000000e+00> : vector<2x128xf32>
    %289 = tpu.matmul %287, %2, %cst_57 {dimension_numbers = #tpu.dot_dimension_numbers<[1], [0], [0], [1], [0, 0, 1, 1], [], []>} : vector<2x32xbf16>, vector<32x128xbf16>, vector<2x128xf32> -> vector<2x128xf32>
    %290 = arith.addf %288, %289 : vector<2x128xf32>
    %291 = vector.extract_strided_slice %290 {offsets = [0, 0], sizes = [2, 32], strides = [1, 1]} : vector<2x128xf32> to vector<2x32xf32>
    %292 = arith.negf %291 : vector<2x32xf32>
    %293 = math.exp %292 : vector<2x32xf32>
    %cst_58 = arith.constant 1.000000e+00 : f32
    %294 = vector.broadcast %cst_58 : f32 to vector<2x32xf32>
    %295 = arith.addf %294, %293 : vector<2x32xf32>
    %296 = arith.divf %294, %295 : vector<2x32xf32>
    %297 = vector.extract_strided_slice %290 {offsets = [0, 32], sizes = [2, 32], strides = [1, 1]} : vector<2x128xf32> to vector<2x32xf32>
    %298 = arith.negf %297 : vector<2x32xf32>
    %299 = math.exp %298 : vector<2x32xf32>
    %cst_59 = arith.constant 1.000000e+00 : f32
    %300 = vector.broadcast %cst_59 : f32 to vector<2x32xf32>
    %301 = arith.addf %300, %299 : vector<2x32xf32>
    %302 = arith.divf %300, %301 : vector<2x32xf32>
    %303 = vector.extract_strided_slice %290 {offsets = [0, 64], sizes = [2, 32], strides = [1, 1]} : vector<2x128xf32> to vector<2x32xf32>
    %304 = math.tanh %303 : vector<2x32xf32>
    %305 = vector.extract_strided_slice %290 {offsets = [0, 96], sizes = [2, 32], strides = [1, 1]} : vector<2x128xf32> to vector<2x32xf32>
    %306 = arith.negf %305 : vector<2x32xf32>
    %307 = math.exp %306 : vector<2x32xf32>
    %cst_60 = arith.constant 1.000000e+00 : f32
    %308 = vector.broadcast %cst_60 : f32 to vector<2x32xf32>
    %309 = arith.addf %308, %307 : vector<2x32xf32>
    %310 = arith.divf %308, %309 : vector<2x32xf32>
    %311 = arith.mulf %302, %252 : vector<2x32xf32>
    %312 = arith.mulf %296, %304 : vector<2x32xf32>
    %313 = arith.addf %311, %312 : vector<2x32xf32>
    %314 = math.tanh %313 : vector<2x32xf32>
    %315 = arith.mulf %310, %314 : vector<2x32xf32>
    %316 = arith.truncf %286 : vector<2x32xf32> to vector<2x32xbf16>
    %317 = arith.truncf %254 : vector<2x32xf32> to vector<2x32xbf16>
    %cst_61 = arith.constant dense<0.000000e+00> : vector<2x128xf32>
    %318 = tpu.matmul %317, %1, %cst_61 {dimension_numbers = #tpu.dot_dimension_numbers<[1], [0], [0], [1], [0, 0, 1, 1], [], []>} : vector<2x32xbf16>, vector<32x128xbf16>, vector<2x128xf32> -> vector<2x128xf32>
    %cst_62 = arith.constant dense<0.000000e+00> : vector<2x128xf32>
    %319 = tpu.matmul %316, %3, %cst_62 {dimension_numbers = #tpu.dot_dimension_numbers<[1], [0], [0], [1], [0, 0, 1, 1], [], []>} : vector<2x32xbf16>, vector<32x128xbf16>, vector<2x128xf32> -> vector<2x128xf32>
    %320 = arith.addf %318, %319 : vector<2x128xf32>
    %321 = vector.broadcast %5 : vector<1x128xf32> to vector<2x128xf32>
    %322 = arith.addf %320, %321 : vector<2x128xf32>
    %323 = vector.extract_strided_slice %322 {offsets = [0, 0], sizes = [2, 32], strides = [1, 1]} : vector<2x128xf32> to vector<2x32xf32>
    %324 = arith.negf %323 : vector<2x32xf32>
    %325 = math.exp %324 : vector<2x32xf32>
    %cst_63 = arith.constant 1.000000e+00 : f32
    %326 = vector.broadcast %cst_63 : f32 to vector<2x32xf32>
    %327 = arith.addf %326, %325 : vector<2x32xf32>
    %328 = arith.divf %326, %327 : vector<2x32xf32>
    %329 = vector.extract_strided_slice %322 {offsets = [0, 32], sizes = [2, 32], strides = [1, 1]} : vector<2x128xf32> to vector<2x32xf32>
    %330 = arith.negf %329 : vector<2x32xf32>
    %331 = math.exp %330 : vector<2x32xf32>
    %cst_64 = arith.constant 1.000000e+00 : f32
    %332 = vector.broadcast %cst_64 : f32 to vector<2x32xf32>
    %333 = arith.addf %332, %331 : vector<2x32xf32>
    %334 = arith.divf %332, %333 : vector<2x32xf32>
    %335 = vector.extract_strided_slice %322 {offsets = [0, 64], sizes = [2, 32], strides = [1, 1]} : vector<2x128xf32> to vector<2x32xf32>
    %336 = math.tanh %335 : vector<2x32xf32>
    %337 = vector.extract_strided_slice %322 {offsets = [0, 96], sizes = [2, 32], strides = [1, 1]} : vector<2x128xf32> to vector<2x32xf32>
    %338 = arith.negf %337 : vector<2x32xf32>
    %339 = math.exp %338 : vector<2x32xf32>
    %cst_65 = arith.constant 1.000000e+00 : f32
    %340 = vector.broadcast %cst_65 : f32 to vector<2x32xf32>
    %341 = arith.addf %340, %339 : vector<2x32xf32>
    %342 = arith.divf %340, %341 : vector<2x32xf32>
    %343 = arith.mulf %334, %284 : vector<2x32xf32>
    %344 = arith.mulf %328, %336 : vector<2x32xf32>
    %345 = arith.addf %343, %344 : vector<2x32xf32>
    %346 = math.tanh %345 : vector<2x32xf32>
    %347 = arith.mulf %342, %346 : vector<2x32xf32>
    %348 = arith.truncf %315 : vector<2x32xf32> to vector<2x32xbf16>
    %349 = vector.extract_strided_slice %9 {offsets = [12, 0], sizes = [2, 128], strides = [1, 1]} : vector<16x128xf32> to vector<2x128xf32>
    %cst_66 = arith.constant dense<0.000000e+00> : vector<2x128xf32>
    %350 = tpu.matmul %348, %2, %cst_66 {dimension_numbers = #tpu.dot_dimension_numbers<[1], [0], [0], [1], [0, 0, 1, 1], [], []>} : vector<2x32xbf16>, vector<32x128xbf16>, vector<2x128xf32> -> vector<2x128xf32>
    %351 = arith.addf %349, %350 : vector<2x128xf32>
    %352 = vector.extract_strided_slice %351 {offsets = [0, 0], sizes = [2, 32], strides = [1, 1]} : vector<2x128xf32> to vector<2x32xf32>
    %353 = arith.negf %352 : vector<2x32xf32>
    %354 = math.exp %353 : vector<2x32xf32>
    %cst_67 = arith.constant 1.000000e+00 : f32
    %355 = vector.broadcast %cst_67 : f32 to vector<2x32xf32>
    %356 = arith.addf %355, %354 : vector<2x32xf32>
    %357 = arith.divf %355, %356 : vector<2x32xf32>
    %358 = vector.extract_strided_slice %351 {offsets = [0, 32], sizes = [2, 32], strides = [1, 1]} : vector<2x128xf32> to vector<2x32xf32>
    %359 = arith.negf %358 : vector<2x32xf32>
    %360 = math.exp %359 : vector<2x32xf32>
    %cst_68 = arith.constant 1.000000e+00 : f32
    %361 = vector.broadcast %cst_68 : f32 to vector<2x32xf32>
    %362 = arith.addf %361, %360 : vector<2x32xf32>
    %363 = arith.divf %361, %362 : vector<2x32xf32>
    %364 = vector.extract_strided_slice %351 {offsets = [0, 64], sizes = [2, 32], strides = [1, 1]} : vector<2x128xf32> to vector<2x32xf32>
    %365 = math.tanh %364 : vector<2x32xf32>
    %366 = vector.extract_strided_slice %351 {offsets = [0, 96], sizes = [2, 32], strides = [1, 1]} : vector<2x128xf32> to vector<2x32xf32>
    %367 = arith.negf %366 : vector<2x32xf32>
    %368 = math.exp %367 : vector<2x32xf32>
    %cst_69 = arith.constant 1.000000e+00 : f32
    %369 = vector.broadcast %cst_69 : f32 to vector<2x32xf32>
    %370 = arith.addf %369, %368 : vector<2x32xf32>
    %371 = arith.divf %369, %370 : vector<2x32xf32>
    %372 = arith.mulf %363, %313 : vector<2x32xf32>
    %373 = arith.mulf %357, %365 : vector<2x32xf32>
    %374 = arith.addf %372, %373 : vector<2x32xf32>
    %375 = math.tanh %374 : vector<2x32xf32>
    %376 = arith.mulf %371, %375 : vector<2x32xf32>
    %377 = arith.truncf %347 : vector<2x32xf32> to vector<2x32xbf16>
    %378 = arith.truncf %315 : vector<2x32xf32> to vector<2x32xbf16>
    %cst_70 = arith.constant dense<0.000000e+00> : vector<2x128xf32>
    %379 = tpu.matmul %378, %1, %cst_70 {dimension_numbers = #tpu.dot_dimension_numbers<[1], [0], [0], [1], [0, 0, 1, 1], [], []>} : vector<2x32xbf16>, vector<32x128xbf16>, vector<2x128xf32> -> vector<2x128xf32>
    %cst_71 = arith.constant dense<0.000000e+00> : vector<2x128xf32>
    %380 = tpu.matmul %377, %3, %cst_71 {dimension_numbers = #tpu.dot_dimension_numbers<[1], [0], [0], [1], [0, 0, 1, 1], [], []>} : vector<2x32xbf16>, vector<32x128xbf16>, vector<2x128xf32> -> vector<2x128xf32>
    %381 = arith.addf %379, %380 : vector<2x128xf32>
    %382 = vector.broadcast %5 : vector<1x128xf32> to vector<2x128xf32>
    %383 = arith.addf %381, %382 : vector<2x128xf32>
    %384 = vector.extract_strided_slice %383 {offsets = [0, 0], sizes = [2, 32], strides = [1, 1]} : vector<2x128xf32> to vector<2x32xf32>
    %385 = arith.negf %384 : vector<2x32xf32>
    %386 = math.exp %385 : vector<2x32xf32>
    %cst_72 = arith.constant 1.000000e+00 : f32
    %387 = vector.broadcast %cst_72 : f32 to vector<2x32xf32>
    %388 = arith.addf %387, %386 : vector<2x32xf32>
    %389 = arith.divf %387, %388 : vector<2x32xf32>
    %390 = vector.extract_strided_slice %383 {offsets = [0, 32], sizes = [2, 32], strides = [1, 1]} : vector<2x128xf32> to vector<2x32xf32>
    %391 = arith.negf %390 : vector<2x32xf32>
    %392 = math.exp %391 : vector<2x32xf32>
    %cst_73 = arith.constant 1.000000e+00 : f32
    %393 = vector.broadcast %cst_73 : f32 to vector<2x32xf32>
    %394 = arith.addf %393, %392 : vector<2x32xf32>
    %395 = arith.divf %393, %394 : vector<2x32xf32>
    %396 = vector.extract_strided_slice %383 {offsets = [0, 64], sizes = [2, 32], strides = [1, 1]} : vector<2x128xf32> to vector<2x32xf32>
    %397 = math.tanh %396 : vector<2x32xf32>
    %398 = vector.extract_strided_slice %383 {offsets = [0, 96], sizes = [2, 32], strides = [1, 1]} : vector<2x128xf32> to vector<2x32xf32>
    %399 = arith.negf %398 : vector<2x32xf32>
    %400 = math.exp %399 : vector<2x32xf32>
    %cst_74 = arith.constant 1.000000e+00 : f32
    %401 = vector.broadcast %cst_74 : f32 to vector<2x32xf32>
    %402 = arith.addf %401, %400 : vector<2x32xf32>
    %403 = arith.divf %401, %402 : vector<2x32xf32>
    %404 = arith.mulf %395, %345 : vector<2x32xf32>
    %405 = arith.mulf %389, %397 : vector<2x32xf32>
    %406 = arith.addf %404, %405 : vector<2x32xf32>
    %407 = math.tanh %406 : vector<2x32xf32>
    %408 = arith.mulf %403, %407 : vector<2x32xf32>
    %409 = arith.truncf %376 : vector<2x32xf32> to vector<2x32xbf16>
    %410 = vector.extract_strided_slice %9 {offsets = [14, 0], sizes = [2, 128], strides = [1, 1]} : vector<16x128xf32> to vector<2x128xf32>
    %cst_75 = arith.constant dense<0.000000e+00> : vector<2x128xf32>
    %411 = tpu.matmul %409, %2, %cst_75 {dimension_numbers = #tpu.dot_dimension_numbers<[1], [0], [0], [1], [0, 0, 1, 1], [], []>} : vector<2x32xbf16>, vector<32x128xbf16>, vector<2x128xf32> -> vector<2x128xf32>
    %412 = arith.addf %410, %411 : vector<2x128xf32>
    %413 = vector.extract_strided_slice %412 {offsets = [0, 0], sizes = [2, 32], strides = [1, 1]} : vector<2x128xf32> to vector<2x32xf32>
    %414 = arith.negf %413 : vector<2x32xf32>
    %415 = math.exp %414 : vector<2x32xf32>
    %cst_76 = arith.constant 1.000000e+00 : f32
    %416 = vector.broadcast %cst_76 : f32 to vector<2x32xf32>
    %417 = arith.addf %416, %415 : vector<2x32xf32>
    %418 = arith.divf %416, %417 : vector<2x32xf32>
    %419 = vector.extract_strided_slice %412 {offsets = [0, 32], sizes = [2, 32], strides = [1, 1]} : vector<2x128xf32> to vector<2x32xf32>
    %420 = arith.negf %419 : vector<2x32xf32>
    %421 = math.exp %420 : vector<2x32xf32>
    %cst_77 = arith.constant 1.000000e+00 : f32
    %422 = vector.broadcast %cst_77 : f32 to vector<2x32xf32>
    %423 = arith.addf %422, %421 : vector<2x32xf32>
    %424 = arith.divf %422, %423 : vector<2x32xf32>
    %425 = vector.extract_strided_slice %412 {offsets = [0, 64], sizes = [2, 32], strides = [1, 1]} : vector<2x128xf32> to vector<2x32xf32>
    %426 = math.tanh %425 : vector<2x32xf32>
    %427 = vector.extract_strided_slice %412 {offsets = [0, 96], sizes = [2, 32], strides = [1, 1]} : vector<2x128xf32> to vector<2x32xf32>
    %428 = arith.negf %427 : vector<2x32xf32>
    %429 = math.exp %428 : vector<2x32xf32>
    %cst_78 = arith.constant 1.000000e+00 : f32
    %430 = vector.broadcast %cst_78 : f32 to vector<2x32xf32>
    %431 = arith.addf %430, %429 : vector<2x32xf32>
    %432 = arith.divf %430, %431 : vector<2x32xf32>
    %433 = arith.mulf %424, %374 : vector<2x32xf32>
    %434 = arith.mulf %418, %426 : vector<2x32xf32>
    %435 = arith.addf %433, %434 : vector<2x32xf32>
    %436 = math.tanh %435 : vector<2x32xf32>
    %437 = arith.mulf %432, %436 : vector<2x32xf32>
    %438 = arith.truncf %408 : vector<2x32xf32> to vector<2x32xbf16>
    %439 = arith.truncf %376 : vector<2x32xf32> to vector<2x32xbf16>
    %cst_79 = arith.constant dense<0.000000e+00> : vector<2x128xf32>
    %440 = tpu.matmul %439, %1, %cst_79 {dimension_numbers = #tpu.dot_dimension_numbers<[1], [0], [0], [1], [0, 0, 1, 1], [], []>} : vector<2x32xbf16>, vector<32x128xbf16>, vector<2x128xf32> -> vector<2x128xf32>
    %cst_80 = arith.constant dense<0.000000e+00> : vector<2x128xf32>
    %441 = tpu.matmul %438, %3, %cst_80 {dimension_numbers = #tpu.dot_dimension_numbers<[1], [0], [0], [1], [0, 0, 1, 1], [], []>} : vector<2x32xbf16>, vector<32x128xbf16>, vector<2x128xf32> -> vector<2x128xf32>
    %442 = arith.addf %440, %441 : vector<2x128xf32>
    %443 = vector.broadcast %5 : vector<1x128xf32> to vector<2x128xf32>
    %444 = arith.addf %442, %443 : vector<2x128xf32>
    %445 = vector.extract_strided_slice %444 {offsets = [0, 0], sizes = [2, 32], strides = [1, 1]} : vector<2x128xf32> to vector<2x32xf32>
    %446 = arith.negf %445 : vector<2x32xf32>
    %447 = math.exp %446 : vector<2x32xf32>
    %cst_81 = arith.constant 1.000000e+00 : f32
    %448 = vector.broadcast %cst_81 : f32 to vector<2x32xf32>
    %449 = arith.addf %448, %447 : vector<2x32xf32>
    %450 = arith.divf %448, %449 : vector<2x32xf32>
    %451 = vector.extract_strided_slice %444 {offsets = [0, 32], sizes = [2, 32], strides = [1, 1]} : vector<2x128xf32> to vector<2x32xf32>
    %452 = arith.negf %451 : vector<2x32xf32>
    %453 = math.exp %452 : vector<2x32xf32>
    %cst_82 = arith.constant 1.000000e+00 : f32
    %454 = vector.broadcast %cst_82 : f32 to vector<2x32xf32>
    %455 = arith.addf %454, %453 : vector<2x32xf32>
    %456 = arith.divf %454, %455 : vector<2x32xf32>
    %457 = vector.extract_strided_slice %444 {offsets = [0, 64], sizes = [2, 32], strides = [1, 1]} : vector<2x128xf32> to vector<2x32xf32>
    %458 = math.tanh %457 : vector<2x32xf32>
    %459 = vector.extract_strided_slice %444 {offsets = [0, 96], sizes = [2, 32], strides = [1, 1]} : vector<2x128xf32> to vector<2x32xf32>
    %460 = arith.negf %459 : vector<2x32xf32>
    %461 = math.exp %460 : vector<2x32xf32>
    %cst_83 = arith.constant 1.000000e+00 : f32
    %462 = vector.broadcast %cst_83 : f32 to vector<2x32xf32>
    %463 = arith.addf %462, %461 : vector<2x32xf32>
    %464 = arith.divf %462, %463 : vector<2x32xf32>
    %465 = arith.mulf %456, %406 : vector<2x32xf32>
    %466 = arith.mulf %450, %458 : vector<2x32xf32>
    %467 = arith.addf %465, %466 : vector<2x32xf32>
    %468 = math.tanh %467 : vector<2x32xf32>
    %469 = arith.mulf %464, %468 : vector<2x32xf32>
    %470 = arith.truncf %469 : vector<2x32xf32> to vector<2x32xbf16>
    %471 = arith.truncf %437 : vector<2x32xf32> to vector<2x32xbf16>
    %cst_84 = arith.constant dense<0.000000e+00> : vector<2x128xf32>
    %472 = tpu.matmul %471, %1, %cst_84 {dimension_numbers = #tpu.dot_dimension_numbers<[1], [0], [0], [1], [0, 0, 1, 1], [], []>} : vector<2x32xbf16>, vector<32x128xbf16>, vector<2x128xf32> -> vector<2x128xf32>
    %cst_85 = arith.constant dense<0.000000e+00> : vector<2x128xf32>
    %473 = tpu.matmul %470, %3, %cst_85 {dimension_numbers = #tpu.dot_dimension_numbers<[1], [0], [0], [1], [0, 0, 1, 1], [], []>} : vector<2x32xbf16>, vector<32x128xbf16>, vector<2x128xf32> -> vector<2x128xf32>
    %474 = arith.addf %472, %473 : vector<2x128xf32>
    %475 = vector.broadcast %5 : vector<1x128xf32> to vector<2x128xf32>
    %476 = arith.addf %474, %475 : vector<2x128xf32>
    %477 = vector.extract_strided_slice %476 {offsets = [0, 0], sizes = [2, 32], strides = [1, 1]} : vector<2x128xf32> to vector<2x32xf32>
    %478 = arith.negf %477 : vector<2x32xf32>
    %479 = math.exp %478 : vector<2x32xf32>
    %cst_86 = arith.constant 1.000000e+00 : f32
    %480 = vector.broadcast %cst_86 : f32 to vector<2x32xf32>
    %481 = arith.addf %480, %479 : vector<2x32xf32>
    %482 = arith.divf %480, %481 : vector<2x32xf32>
    %483 = vector.extract_strided_slice %476 {offsets = [0, 32], sizes = [2, 32], strides = [1, 1]} : vector<2x128xf32> to vector<2x32xf32>
    %484 = arith.negf %483 : vector<2x32xf32>
    %485 = math.exp %484 : vector<2x32xf32>
    %cst_87 = arith.constant 1.000000e+00 : f32
    %486 = vector.broadcast %cst_87 : f32 to vector<2x32xf32>
    %487 = arith.addf %486, %485 : vector<2x32xf32>
    %488 = arith.divf %486, %487 : vector<2x32xf32>
    %489 = vector.extract_strided_slice %476 {offsets = [0, 64], sizes = [2, 32], strides = [1, 1]} : vector<2x128xf32> to vector<2x32xf32>
    %490 = math.tanh %489 : vector<2x32xf32>
    %491 = vector.extract_strided_slice %476 {offsets = [0, 96], sizes = [2, 32], strides = [1, 1]} : vector<2x128xf32> to vector<2x32xf32>
    %492 = arith.negf %491 : vector<2x32xf32>
    %493 = math.exp %492 : vector<2x32xf32>
    %cst_88 = arith.constant 1.000000e+00 : f32
    %494 = vector.broadcast %cst_88 : f32 to vector<2x32xf32>
    %495 = arith.addf %494, %493 : vector<2x32xf32>
    %496 = arith.divf %494, %495 : vector<2x32xf32>
    %497 = arith.mulf %488, %467 : vector<2x32xf32>
    %498 = arith.mulf %482, %490 : vector<2x32xf32>
    %499 = arith.addf %497, %498 : vector<2x32xf32>
    %500 = math.tanh %499 : vector<2x32xf32>
    %501 = arith.mulf %496, %500 : vector<2x32xf32>
    %502 = arith.truncf %501 : vector<2x32xf32> to vector<2x32xbf16>
    %c0_89 = arith.constant 0 : index
    %c0_90 = arith.constant 0 : index
    %503 = vector.load %arg7[%c0_89, %c0_90] : memref<32x4xbf16, #tpu.memory_space<vmem>>, vector<32x4xbf16>
    %cst_91 = arith.constant dense<0.000000e+00> : vector<2x4xf32>
    %504 = tpu.matmul %502, %503, %cst_91 {dimension_numbers = #tpu.dot_dimension_numbers<[1], [0], [0], [1], [0, 0, 1, 1], [], []>} : vector<2x32xbf16>, vector<32x4xbf16>, vector<2x4xf32> -> vector<2x4xf32>
    %c0_92 = arith.constant 0 : index
    %c0_93 = arith.constant 0 : index
    %505 = vector.load %arg8[%c0_92, %c0_93] : memref<1x4xf32, #tpu.memory_space<vmem>>, vector<1x4xf32>
    %506 = vector.broadcast %505 : vector<1x4xf32> to vector<2x4xf32>
    %507 = arith.addf %504, %506 : vector<2x4xf32>
    %c0_94 = arith.constant 0 : index
    %c0_95 = arith.constant 0 : index
    %508 = vector.load %arg9[%c0_94, %c0_95] : memref<2x4xf32, #tpu.memory_space<vmem>>, vector<2x4xf32>
    tpu.vector_store %arg9[%c0_94, %c0_95], %507 {strides = array<i32>} : memref<2x4xf32, #tpu.memory_space<vmem>>, vector<2x4xf32>,
    return
  }
}

</mosaic_0001>

<llo_original>
// kernel: tpu_custom_call.1
$region0: #{tpu_custom_call.1}
  #allocation0 [shape = 'u32[]', space=smem, size = 0x4, offset = 0x4, fixed_abs, tag = 'smem constant byte address 0x4 - core index']
  #allocation1 [shape = 'u32[144,128]{1,0:T(1,128)}', space=vmem, size = 0x12000, scoped, tag = 'internal scratch']
  %s0 = inlined_call_operand.hbm [shape: bf16[16,16], index: 0, kind: input, shape index: {}]
  %s1 = inlined_call_operand.hbm [shape: bf16[16,128], index: 1, kind: input, shape index: {}]
  %s2 = inlined_call_operand.vmem [shape: bf16[32,128], index: 2, kind: input, shape index: {}]
  %s3 = inlined_call_operand.vmem [shape: f32[1,128], index: 3, kind: input, shape index: {}]
  %s4 = inlined_call_operand.hbm [shape: bf16[32,128], index: 4, kind: input, shape index: {}]
  %s5 = inlined_call_operand.hbm [shape: bf16[32,128], index: 5, kind: input, shape index: {}]
  %s6 = inlined_call_operand.vmem [shape: f32[1,128], index: 6, kind: input, shape index: {}]
  %s7 = inlined_call_operand.vmem [shape: bf16[32,4], index: 7, kind: input, shape index: {}]
  %s8 = inlined_call_operand.vmem [shape: f32[1,4], index: 8, kind: input, shape index: {}]
  %s9 = inlined_call_operand.hbm [shape: f32[2,4], index: 9, kind: output, shape index: {}]
  %s10 = sld [smem:[#allocation0]]
  $region62: #{tpu_custom_call.1} parent=0
    _
  %s12 = ssub.s32 1, %s10
  %s13 = scalar_select 0, %s12, %s10
  $region1: #{tpu_custom_call.1} parent=0
    #allocation2 [shape = 'u8[4096]{0}', space=vmem, size = 0x1000, scoped, tag = 'input window, operand 0, single buffered']
    #allocation3 [shape = 's32[1]{0}', space=sflag, size = 0x4, scoped, tag = 'scoped memory for tpu_custom_call.1']
    #allocation4 [shape = 's32[1]{0}', space=sflag, size = 0x4, scoped, tag = 'scoped memory for tpu_custom_call.1']
    #allocation5 [shape = 'u8[4096]{0}', space=vmem, size = 0x1000, scoped, tag = 'input window, operand 1, single buffered']
    #allocation6 [shape = 's32[1]{0}', space=sflag, size = 0x4, scoped, tag = 'scoped memory for tpu_custom_call.1']
    #allocation7 [shape = 'u8[8192]{0}', space=vmem, size = 0x2000, scoped, tag = 'input window, operand 4, single buffered']
    #allocation8 [shape = 'u8[8192]{0}', space=vmem, size = 0x2000, scoped, tag = 'input window, operand 5, single buffered']
    #allocation9 [shape = 's32[1]{0}', space=sflag, size = 0x4, scoped, tag = 'scoped memory for tpu_custom_call.1']
    #allocation10 [shape = 'u8[1024]{0}', space=vmem, size = 0x400, scoped, tag = 'output window, operand 0, single buffered']
    %14 = vsyncpa [#allocation3], 0
    %15 = vsyncpa [#allocation6], 0
    %16 = vsyncpa [#allocation9], 0
    %17 = vsyncpa [#allocation4], 0
    // Predicated region
    $region2: #{tpu_custom_call.1} parent=1 // pred_check
      _
    $region3: #{tpu_custom_call.1} parent=1 // pred_check_branch
      %19 = sbr.rel (0) target = $region5
    $region4: #{tpu_custom_call.1} parent=1 // pred_region
      %s21 = ssub.s32 128, 128
      %22 = vsyncadd [#allocation3], %s21
      %s23 = sshll.u32 [#allocation2], 4
      %s24 = int_to_ptr.vmem [resolvable:$true] %s23
      %29 = dma.hbm_to_vmem [thread:$0]  %s0, 128, %s24, [#allocation3], 64, 64, 4
    $region5: #{tpu_custom_call.1} parent=1 // pred_fallthru
      _
    // Predicated region
    $region6: #{tpu_custom_call.1} parent=1 // pred_check
      _
    $region7: #{tpu_custom_call.1} parent=1 // pred_check_branch
      %31 = sbr.rel (0) target = $region9
    $region8: #{tpu_custom_call.1} parent=1 // pred_region
      %s33 = ssub.s32 128, 128
      %34 = vsyncadd [#allocation6], %s33
      %s35 = sshll.u32 [#allocation5], 4
      %s36 = int_to_ptr.vmem [resolvable:$true] %s35
      %41 = dma.hbm_to_vmem [thread:$0]  %s1, 128, %s36, [#allocation6], 64, 64, 4
    $region9: #{tpu_custom_call.1} parent=1 // pred_fallthru
      _
    // Predicated region
    $region10: #{tpu_custom_call.1} parent=1 // pred_check
      _
    $region11: #{tpu_custom_call.1} parent=1 // pred_check_branch
      %43 = sbr.rel (0) target = $region13
    $region12: #{tpu_custom_call.1} parent=1 // pred_region
      _
    $region13: #{tpu_custom_call.1} parent=1 // pred_fallthru
      _
    // Predicated region
    $region14: #{tpu_custom_call.1} parent=1 // pred_check
      _
    $region15: #{tpu_custom_call.1} parent=1 // pred_check_branch
      %45 = sbr.rel (0) target = $region17
    $region16: #{tpu_custom_call.1} parent=1 // pred_region
      _
    $region17: #{tpu_custom_call.1} parent=1 // pred_fallthru
      _
    // Predicated region
    $region18: #{tpu_custom_call.1} parent=1 // pred_check
      _
    $region19: #{tpu_custom_call.1} parent=1 // pred_check_branch
      %47 = sbr.rel (0) target = $region21
    $region20: #{tpu_custom_call.1} parent=1 // pred_region
      %s49 = ssub.s32 256, 256
      %50 = vsyncadd [#allocation6], %s49
      %s51 = sshll.u32 [#allocation7], 4
      %s52 = int_to_ptr.vmem [resolvable:$true] %s51
      %57 = dma.hbm_to_vmem [thread:$0]  %s4, 256, %s52, [#allocation6], 64, 64, 4
    $region21: #{tpu_custom_call.1} parent=1 // pred_fallthru
      _
    // Predicated region
    $region22: #{tpu_custom_call.1} parent=1 // pred_check
      _
    $region23: #{tpu_custom_call.1} parent=1 // pred_check_branch
      %59 = sbr.rel (0) target = $region25
    $region24: #{tpu_custom_call.1} parent=1 // pred_region
      %s61 = ssub.s32 256, 256
      %62 = vsyncadd [#allocation9], %s61
      %s63 = sshll.u32 [#allocation8], 4
      %s64 = int_to_ptr.vmem [resolvable:$true] %s63
      %69 = dma.hbm_to_vmem [thread:$0]  %s5, 256, %s64, [#allocation9], 64, 64, 4
    $region25: #{tpu_custom_call.1} parent=1 // pred_fallthru
      _
    // Predicated region
    $region26: #{tpu_custom_call.1} parent=1 // pred_check
      _
    $region27: #{tpu_custom_call.1} parent=1 // pred_check_branch
      %71 = sbr.rel (0) target = $region29
    $region28: #{tpu_custom_call.1} parent=1 // pred_region
      _
    $region29: #{tpu_custom_call.1} parent=1 // pred_fallthru
      _
    // Predicated region
    $region30: #{tpu_custom_call.1} parent=1 // pred_check
      _
    $region31: #{tpu_custom_call.1} parent=1 // pred_check_branch
      %73 = sbr.rel (0) target = $region33
    $region32: #{tpu_custom_call.1} parent=1 // pred_region
      _
    $region33: #{tpu_custom_call.1} parent=1 // pred_fallthru
      _
    // Predicated region
    $region34: #{tpu_custom_call.1} parent=1 // pred_check
      _
    $region35: #{tpu_custom_call.1} parent=1 // pred_check_branch
      %75 = sbr.rel (0) target = $region37
    $region36: #{tpu_custom_call.1} parent=1 // pred_region
      _
    $region37: #{tpu_custom_call.1} parent=1 // pred_fallthru
      _
    // Predicated region
    $region38: #{tpu_custom_call.1} parent=1 // pred_check
      _
    $region39: #{tpu_custom_call.1} parent=1 // pred_check_branch
      %77 = sbr.rel (0) target = $region41
    $region40: #{tpu_custom_call.1} parent=1 // pred_region
      %78 = dma.done [#allocation3], 128
    $region41: #{tpu_custom_call.1} parent=1 // pred_fallthru
      _
    // Predicated region
    $region42: #{tpu_custom_call.1} parent=1 // pred_check
      _
    $region43: #{tpu_custom_call.1} parent=1 // pred_check_branch
      %80 = sbr.rel (0) target = $region45
    $region44: #{tpu_custom_call.1} parent=1 // pred_region
      %81 = dma.done [#allocation6], 128
    $region45: #{tpu_custom_call.1} parent=1 // pred_fallthru
      _
    // Predicated region
    $region46: #{tpu_custom_call.1} parent=1 // pred_check
      _
    $region47: #{tpu_custom_call.1} parent=1 // pred_check_branch
      %83 = sbr.rel (0) target = $region49
    $region48: #{tpu_custom_call.1} parent=1 // pred_region
      %84 = dma.done [#allocation6], 256
    $region49: #{tpu_custom_call.1} parent=1 // pred_fallthru
      _
    // Predicated region
    $region50: #{tpu_custom_call.1} parent=1 // pred_check
      _
    $region51: #{tpu_custom_call.1} parent=1 // pred_check_branch
      %86 = sbr.rel (0) target = $region53
    $region52: #{tpu_custom_call.1} parent=1 // pred_region
      %87 = dma.done [#allocation9], 256
    $region53: #{tpu_custom_call.1} parent=1 // pred_fallthru
      _
    %v89 = vld [vmem:[#allocation5] sm:$0xf]
    %v90 = vld [vmem:[#allocation5 + $0x4] sm:$0xf]
    %v91 = vld [vmem:[#allocation7] sm:$0xf]
    %v92 = vld [vmem:[#allocation7 + $0x4] sm:$0xf]
    %v93 = vld [vmem:[#allocation7 + $0x8] sm:$0xf]
    %v94 = vld [vmem:[#allocation7 + $0xc] sm:$0xf]
    %v95 = vld [vmem:[%s2] sm:$0xf]
    %v96 = vld [vmem:[%s2 + $0x4] sm:$0xf]
    %v97 = vld [vmem:[%s2 + $0x8] sm:$0xf]
    %v98 = vld [vmem:[%s2 + $0xc] sm:$0xf]
    %v99 = vld [vmem:[#allocation8] sm:$0xf]
    %v100 = vld [vmem:[#allocation8 + $0x4] sm:$0xf]
    %v101 = vld [vmem:[#allocation8 + $0x8] sm:$0xf]
    %v102 = vld [vmem:[#allocation8 + $0xc] sm:$0xf]
    %v103 = vld [vmem:[%s3] sm:$0x1]
    %v104 = vld [vmem:[%s6] sm:$0x1]
    %v105 = vld [vmem:[#allocation2] sm:$0xf]
    %v106 = vld [vmem:[#allocation2 + $0x4] sm:$0xf]
    %v108 = vlaneseq
    %v109 = vshrl.u32 %v108, 7
    %v110 = vsub.s32 0, %v109
    %v111 = vrot.slane %v103, %v110
    %v115 = vunpack.c.l.b16 %v105
    %v116 = vunpack.c.l.b16 %v106
    %v117 = vpack.c.b16 %v116, %v115
    %v120 = vunpack.c.l.b16 %v89
    %v121 = vunpack.c.l.b16 %v90
    %v122 = vpack.c.b16 %v121, %v120
    %vm124 = vcmask 130048
    %v126 = vsel %vm124, %v117, 0
    %128 = vmatprep.subr.bf16.mxu0 0
    %129 = vmatpush1.bf16.msra.mxu0 0
    %130 = vmatprep.subr.bf16.mxu0 0
    %131 = vmatpush1.bf16.msra.mxu0 0
    %132 = vmatprep.subr.bf16.mxu0 0
    %133 = vmatpush1.bf16.msra.mxu0 0
    %134 = vmatprep.subr.bf16.mxu0 0
    %135 = vmatpush1.bf16.msra.mxu0 0
    %136 = vmatprep.subr.bf16.mxu0 0
    %137 = vmatpush1.bf16.msra.mxu0 0
    %138 = vmatprep.subr.bf16.mxu0 0
    %139 = vmatpush1.bf16.msra.mxu0 0
    %140 = vmatprep.subr.bf16.mxu0 0
    %141 = vmatpush1.bf16.msra.mxu0 0
    %142 = vmatprep.subr.bf16.mxu0 0
    %143 = vmatpush1.bf16.msra.mxu0 %v122
    %144 = vmatprep.subr.bf16.mxu0 0
    %145 = vmatpush2.bf16.msra.mxu0 0
    %146 = vmatprep.subr.bf16.mxu0 0
    %147 = vmatpush2.bf16.msra.mxu0 0
    %148 = vmatprep.subr.bf16.mxu0 0
    %149 = vmatpush2.bf16.msra.mxu0 0
    %150 = vmatprep.subr.bf16.mxu0 0
    %151 = vmatpush2.bf16.msra.mxu0 0
    %152 = vmatprep.subr.bf16.mxu0 0
    %153 = vmatpush2.bf16.msra.mxu0 0
    %154 = vmatprep.subr.bf16.mxu0 0
    %155 = vmatpush2.bf16.msra.mxu0 0
    %156 = vmatprep.subr.bf16.mxu0 0
    %157 = vmatpush2.bf16.msra.mxu0 0
    %158 = vmatprep.subr.bf16.mxu0 0
    %159 = vmatpush2.bf16.msra.mxu0 0
    %160 = vmatprep.mubr.bf16.mxu0 0
    %161 = vmatmul.mubr.bf16.gmra.mxu0 %v126
    %v162 = vpop.f32.mrf.mxu0
    %v163 = vadd.f32 %v111, %v162
    %v164 = vpop.f32.mrf.mxu0
    %v165 = vpop.f32.mrf.mxu0
    %v166 = vadd.f32 %v111, %v165
    %v167 = vpop.f32.mrf.mxu0
    %168 = vdwg.mxu0
    %v173 = vunpack.c.l.b16 %v95
    %v174 = vunpack.c.l.b16 %v96
    %v175 = vunpack.c.l.b16 %v97
    %v176 = vunpack.c.l.b16 %v98
    %v177 = vpack.c.b16 %v174, %v173
    %v178 = vpack.c.b16 %v176, %v175
    %vm181 = vcmask 261120
    %v183 = vsel %vm181, 0, 0
    %185 = vmatprep.subr.bf16.mxu0 0
    %186 = vmatpush1.bf16.msra.mxu0 0
    %187 = vmatprep.subr.bf16.mxu0 0
    %188 = vmatpush1.bf16.msra.mxu0 0
    %189 = vmatprep.subr.bf16.mxu0 0
    %190 = vmatpush1.bf16.msra.mxu0 0
    %191 = vmatprep.subr.bf16.mxu0 0
    %192 = vmatpush1.bf16.msra.mxu0 0
    %193 = vmatprep.subr.bf16.mxu0 0
    %194 = vmatpush1.bf16.msra.mxu0 0
    %195 = vmatprep.subr.bf16.mxu0 0
    %196 = vmatpush1.bf16.msra.mxu0 0
    %197 = vmatprep.subr.bf16.mxu0 0
    %198 = vmatpush1.bf16.msra.mxu0 %v178
    %199 = vmatprep.subr.bf16.mxu0 0
    %200 = vmatpush1.bf16.msra.mxu0 %v177
    %201 = vmatprep.subr.bf16.mxu0 0
    %202 = vmatpush2.bf16.msra.mxu0 0
    %203 = vmatprep.subr.bf16.mxu0 0
    %204 = vmatpush2.bf16.msra.mxu0 0
    %205 = vmatprep.subr.bf16.mxu0 0
    %206 = vmatpush2.bf16.msra.mxu0 0
    %207 = vmatprep.subr.bf16.mxu0 0
    %208 = vmatpush2.bf16.msra.mxu0 0
    %209 = vmatprep.subr.bf16.mxu0 0
    %210 = vmatpush2.bf16.msra.mxu0 0
    %211 = vmatprep.subr.bf16.mxu0 0
    %212 = vmatpush2.bf16.msra.mxu0 0
    %213 = vmatprep.subr.bf16.mxu0 0
    %214 = vmatpush2.bf16.msra.mxu0 0
    %215 = vmatprep.subr.bf16.mxu0 0
    %216 = vmatpush2.bf16.msra.mxu0 0
    %217 = vmatprep.mubr.bf16.mxu0 0
    %218 = vmatmul.mubr.bf16.gmra.mxu0 %v183
    %v219 = vpop.f32.mrf.mxu0
    %v220 = vadd.f32 0.0, %v219
    %v221 = vpop.f32.mrf.mxu0
    %v222 = vpop.f32.mrf.mxu0
    %v223 = vpop.f32.mrf.mxu0
    %224 = vdwg.mxu0
    %v225 = vadd.f32 %v163, %v220
    %v226 = vxor.u32 %v225, 2147483648
    %v227 = vmul.f32 %v226, 1.442695
    %v228 = vpow.pop %v227
    %v229 = vadd.f32 %v228, 1.0
    %v230 = vrcp.pop %v229
    %v231 = vmul.f32 1.0, %v230
    %v232 = vtanh.pop %v225
    %v233 = vmul.f32 %v231, 0.0
    %235 = vrot.lane.b32.xlu0 %v232, 64
    %v236 = vpop.permute.xlu0 %235
    %v238 = vmul.f32 %v231, %v236
    %240 = vrot.lane.b32.xlu0 %v238, 32
    %v241 = vpop.permute.xlu0 %240
    %v243 = vadd.f32 %v233, %v241
    %v244 = vtanh.pop %v243
    %246 = vrot.lane.b32.xlu0 %v244, 64
    %v247 = vpop.permute.xlu0 %246
    %v249 = vmul.f32 %v231, %v247
    %v250 = vpack.c.bf16 %v249, %v249
    %252 = vrot.lane.b32.xlu0 %v250, 32
    %v253 = vpop.permute.xlu0 %252
    %v255 = vsel %vm181, %v253, 0
    %257 = vmatprep.subr.bf16.mxu0 0
    %258 = vmatpush1.bf16.msra.mxu0 0
    %259 = vmatprep.subr.bf16.mxu0 0
    %260 = vmatpush1.bf16.msra.mxu0 0
    %261 = vmatprep.subr.bf16.mxu0 0
    %262 = vmatpush1.bf16.msra.mxu0 0
    %263 = vmatprep.subr.bf16.mxu0 0
    %264 = vmatpush1.bf16.msra.mxu0 0
    %265 = vmatprep.subr.bf16.mxu0 0
    %266 = vmatpush1.bf16.msra.mxu0 0
    %267 = vmatprep.subr.bf16.mxu0 0
    %268 = vmatpush1.bf16.msra.mxu0 0
    %269 = vmatprep.subr.bf16.mxu0 0
    %270 = vmatpush1.bf16.msra.mxu0 %v178
    %271 = vmatprep.subr.bf16.mxu0 0
    %272 = vmatpush1.bf16.msra.mxu0 %v177
    %273 = vmatprep.subr.bf16.mxu0 0
    %274 = vmatpush2.bf16.msra.mxu0 0
    %275 = vmatprep.subr.bf16.mxu0 0
    %276 = vmatpush2.bf16.msra.mxu0 0
    %277 = vmatprep.subr.bf16.mxu0 0
    %278 = vmatpush2.bf16.msra.mxu0 0
    %279 = vmatprep.subr.bf16.mxu0 0
    %280 = vmatpush2.bf16.msra.mxu0 0
    %281 = vmatprep.subr.bf16.mxu0 0
    %282 = vmatpush2.bf16.msra.mxu0 0
    %283 = vmatprep.subr.bf16.mxu0 0
    %284 = vmatpush2.bf16.msra.mxu0 0
    %285 = vmatprep.subr.bf16.mxu0 0
    %286 = vmatpush2.bf16.msra.mxu0 0
    %287 = vmatprep.subr.bf16.mxu0 0
    %288 = vmatpush2.bf16.msra.mxu0 0
    %289 = vmatprep.mubr.bf16.mxu0 0
    %290 = vmatmul.mubr.bf16.gmra.mxu0 %v255
    %v291 = vpop.f32.mrf.mxu0
    %v292 = vadd.f32 0.0, %v291
    %v293 = vpop.f32.mrf.mxu0
    %v294 = vpop.f32.mrf.mxu0
    %v295 = vpop.f32.mrf.mxu0
    %296 = vdwg.mxu0
    %v298 = vrot.slane %v292, 6
    %v300 = vadd.f32 %v163, %v298
    %v301 = vxor.u32 %v300, 2147483648
    %v302 = vmul.f32 %v301, 1.442695
    %v303 = vpow.pop %v302
    %v304 = vadd.f32 %v303, 1.0
    %v305 = vrcp.pop %v304
    %v306 = vmul.f32 1.0, %v305
    %v307 = vtanh.pop %v300
    %v309 = vrot.slane %v243, 6
    %v311 = vmul.f32 %v306, %v309
    %313 = vrot.lane.b32.xlu0 %v307, 64
    %v314 = vpop.permute.xlu0 %313
    %v316 = vmul.f32 %v306, %v314
    %318 = vrot.lane.b32.xlu0 %v316, 32
    %v319 = vpop.permute.xlu0 %318
    %v321 = vadd.f32 %v311, %v319
    %v322 = vtanh.pop %v321
    %324 = vrot.lane.b32.xlu0 %v322, 64
    %v325 = vpop.permute.xlu0 %324
    %v327 = vmul.f32 %v306, %v325
    %v332 = vunpack.c.l.b16 %v99
    %v333 = vunpack.c.l.b16 %v100
    %v334 = vunpack.c.l.b16 %v101
    %v335 = vunpack.c.l.b16 %v102
    %v336 = vpack.c.b16 %v333, %v332
    %v337 = vpack.c.b16 %v335, %v334
    %340 = vmatprep.subr.bf16.mxu0 0
    %341 = vmatpush1.bf16.msra.mxu0 0
    %342 = vmatprep.subr.bf16.mxu0 0
    %343 = vmatpush1.bf16.msra.mxu0 0
    %344 = vmatprep.subr.bf16.mxu0 0
    %345 = vmatpush1.bf16.msra.mxu0 0
    %346 = vmatprep.subr.bf16.mxu0 0
    %347 = vmatpush1.bf16.msra.mxu0 0
    %348 = vmatprep.subr.bf16.mxu0 0
    %349 = vmatpush1.bf16.msra.mxu0 0
    %350 = vmatprep.subr.bf16.mxu0 0
    %351 = vmatpush1.bf16.msra.mxu0 0
    %352 = vmatprep.subr.bf16.mxu0 0
    %353 = vmatpush1.bf16.msra.mxu0 %v337
    %354 = vmatprep.subr.bf16.mxu0 0
    %355 = vmatpush1.bf16.msra.mxu0 %v336
    %356 = vmatprep.subr.bf16.mxu0 0
    %357 = vmatpush2.bf16.msra.mxu0 0
    %358 = vmatprep.subr.bf16.mxu0 0
    %359 = vmatpush2.bf16.msra.mxu0 0
    %360 = vmatprep.subr.bf16.mxu0 0
    %361 = vmatpush2.bf16.msra.mxu0 0
    %362 = vmatprep.subr.bf16.mxu0 0
    %363 = vmatpush2.bf16.msra.mxu0 0
    %364 = vmatprep.subr.bf16.mxu0 0
    %365 = vmatpush2.bf16.msra.mxu0 0
    %366 = vmatprep.subr.bf16.mxu0 0
    %367 = vmatpush2.bf16.msra.mxu0 0
    %368 = vmatprep.subr.bf16.mxu0 0
    %369 = vmatpush2.bf16.msra.mxu0 0
    %370 = vmatprep.subr.bf16.mxu0 0
    %371 = vmatpush2.bf16.msra.mxu0 0
    %372 = vmatprep.mubr.bf16.mxu0 0
    %373 = vmatmul.mubr.bf16.gmra.mxu0 %v183
    %v374 = vpop.f32.mrf.mxu0
    %v375 = vadd.f32 0.0, %v374
    %v376 = vpop.f32.mrf.mxu0
    %v377 = vpop.f32.mrf.mxu0
    %v378 = vpop.f32.mrf.mxu0
    %379 = vdwg.mxu0
    %v384 = vunpack.c.l.b16 %v91
    %v385 = vunpack.c.l.b16 %v92
    %v386 = vunpack.c.l.b16 %v93
    %v387 = vunpack.c.l.b16 %v94
    %v388 = vpack.c.b16 %v385, %v384
    %v389 = vpack.c.b16 %v387, %v386
    %392 = vmatprep.subr.bf16.mxu0 0
    %393 = vmatpush1.bf16.msra.mxu0 0
    %394 = vmatprep.subr.bf16.mxu0 0
    %395 = vmatpush1.bf16.msra.mxu0 0
    %396 = vmatprep.subr.bf16.mxu0 0
    %397 = vmatpush1.bf16.msra.mxu0 0
    %398 = vmatprep.subr.bf16.mxu0 0
    %399 = vmatpush1.bf16.msra.mxu0 0
    %400 = vmatprep.subr.bf16.mxu0 0
    %401 = vmatpush1.bf16.msra.mxu0 0
    %402 = vmatprep.subr.bf16.mxu0 0
    %403 = vmatpush1.bf16.msra.mxu0 0
    %404 = vmatprep.subr.bf16.mxu0 0
    %405 = vmatpush1.bf16.msra.mxu0 %v389
    %406 = vmatprep.subr.bf16.mxu0 0
    %407 = vmatpush1.bf16.msra.mxu0 %v388
    %408 = vmatprep.subr.bf16.mxu0 0
    %409 = vmatpush2.bf16.msra.mxu0 0
    %410 = vmatprep.subr.bf16.mxu0 0
    %411 = vmatpush2.bf16.msra.mxu0 0
    %412 = vmatprep.subr.bf16.mxu0 0
    %413 = vmatpush2.bf16.msra.mxu0 0
    %414 = vmatprep.subr.bf16.mxu0 0
    %415 = vmatpush2.bf16.msra.mxu0 0
    %416 = vmatprep.subr.bf16.mxu0 0
    %417 = vmatpush2.bf16.msra.mxu0 0
    %418 = vmatprep.subr.bf16.mxu0 0
    %419 = vmatpush2.bf16.msra.mxu0 0
    %420 = vmatprep.subr.bf16.mxu0 0
    %421 = vmatpush2.bf16.msra.mxu0 0
    %422 = vmatprep.subr.bf16.mxu0 0
    %423 = vmatpush2.bf16.msra.mxu0 0
    %424 = vmatprep.mubr.bf16.mxu0 0
    %425 = vmatmul.mubr.bf16.gmra.mxu0 %v255
    %v426 = vpop.f32.mrf.mxu0
    %v427 = vadd.f32 %v375, %v426
    %v428 = vpop.f32.mrf.mxu0
    %v429 = vpop.f32.mrf.mxu0
    %v430 = vpop.f32.mrf.mxu0
    %431 = vdwg.mxu0
    %v433 = vlaneseq
    %v434 = vshrl.u32 %v433, 7
    %v435 = vsub.s32 0, %v434
    %v436 = vrot.slane %v104, %v435
    %v438 = vadd.f32 %v427, %v436
    %v439 = vxor.u32 %v438, 2147483648
    %v440 = vmul.f32 %v439, 1.442695
    %v441 = vpow.pop %v440
    %v442 = vadd.f32 %v441, 1.0
    %v443 = vrcp.pop %v442
    %v444 = vmul.f32 1.0, %v443
    %v445 = vtanh.pop %v438
    %v446 = vmul.f32 %v444, 0.0
    %448 = vrot.lane.b32.xlu0 %v445, 64
    %v449 = vpop.permute.xlu0 %448
    %v451 = vmul.f32 %v444, %v449
    %453 = vrot.lane.b32.xlu0 %v451, 32
    %v454 = vpop.permute.xlu0 %453
    %v456 = vadd.f32 %v446, %v454
    %v457 = vtanh.pop %v456
    %459 = vrot.lane.b32.xlu0 %v457, 64
    %v460 = vpop.permute.xlu0 %459
    %v462 = vmul.f32 %v444, %v460
    %v463 = vpack.c.bf16 %v327, %v327
    %v465 = vrot.slane %v463, 1
    %466 = vrot.lane.b32.xlu0 %v465, 32
    %v467 = vpop.permute.xlu0 %466
    %v469 = vsel %vm181, %v467, 0
    %471 = vmatprep.subr.bf16.mxu0 0
    %472 = vmatpush1.bf16.msra.mxu0 0
    %473 = vmatprep.subr.bf16.mxu0 0
    %474 = vmatpush1.bf16.msra.mxu0 0
    %475 = vmatprep.subr.bf16.mxu0 0
    %476 = vmatpush1.bf16.msra.mxu0 0
    %477 = vmatprep.subr.bf16.mxu0 0
    %478 = vmatpush1.bf16.msra.mxu0 0
    %479 = vmatprep.subr.bf16.mxu0 0
    %480 = vmatpush1.bf16.msra.mxu0 0
    %481 = vmatprep.subr.bf16.mxu0 0
    %482 = vmatpush1.bf16.msra.mxu0 0
    %483 = vmatprep.subr.bf16.mxu0 0
    %484 = vmatpush1.bf16.msra.mxu0 %v178
    %485 = vmatprep.subr.bf16.mxu0 0
    %486 = vmatpush1.bf16.msra.mxu0 %v177
    %487 = vmatprep.subr.bf16.mxu0 0
    %488 = vmatpush2.bf16.msra.mxu0 0
    %489 = vmatprep.subr.bf16.mxu0 0
    %490 = vmatpush2.bf16.msra.mxu0 0
    %491 = vmatprep.subr.bf16.mxu0 0
    %492 = vmatpush2.bf16.msra.mxu0 0
    %493 = vmatprep.subr.bf16.mxu0 0
    %494 = vmatpush2.bf16.msra.mxu0 0
    %495 = vmatprep.subr.bf16.mxu0 0
    %496 = vmatpush2.bf16.msra.mxu0 0
    %497 = vmatprep.subr.bf16.mxu0 0
    %498 = vmatpush2.bf16.msra.mxu0 0
    %499 = vmatprep.subr.bf16.mxu0 0
    %500 = vmatpush2.bf16.msra.mxu0 0
    %501 = vmatprep.subr.bf16.mxu0 0
    %502 = vmatpush2.bf16.msra.mxu0 0
    %503 = vmatprep.mubr.bf16.mxu0 0
    %504 = vmatmul.mubr.bf16.gmra.mxu0 %v469
    %v505 = vpop.f32.mrf.mxu0
    %v506 = vadd.f32 0.0, %v505
    %v507 = vpop.f32.mrf.mxu0
    %v508 = vpop.f32.mrf.mxu0
    %v509 = vpop.f32.mrf.mxu0
    %510 = vdwg.mxu0
    %v512 = vrot.slane %v506, 4
    %v514 = vadd.f32 %v163, %v512
    %v515 = vxor.u32 %v514, 2147483648
    %v516 = vmul.f32 %v515, 1.442695
    %v517 = vpow.pop %v516
    %v518 = vadd.f32 %v517, 1.0
    %v519 = vrcp.pop %v518
    %v520 = vmul.f32 1.0, %v519
    %v521 = vtanh.pop %v514
    %v523 = vrot.slane %v321, 6
    %v525 = vmul.f32 %v520, %v523
    %527 = vrot.lane.b32.xlu0 %v521, 64
    %v528 = vpop.permute.xlu0 %527
    %v530 = vmul.f32 %v520, %v528
    %532 = vrot.lane.b32.xlu0 %v530, 32
    %v533 = vpop.permute.xlu0 %532
    %v535 = vadd.f32 %v525, %v533
    %v536 = vtanh.pop %v535
    %538 = vrot.lane.b32.xlu0 %v536, 64
    %v539 = vpop.permute.xlu0 %538
    %v541 = vmul.f32 %v520, %v539
    %v542 = vpack.c.bf16 %v462, %v462
    %544 = vrot.lane.b32.xlu0 %v542, 32
    %v545 = vpop.permute.xlu0 %544
    %v547 = vsel %vm181, %v545, 0
    %549 = vmatprep.subr.bf16.mxu0 0
    %550 = vmatpush1.bf16.msra.mxu0 0
    %551 = vmatprep.subr.bf16.mxu0 0
    %552 = vmatpush1.bf16.msra.mxu0 0
    %553 = vmatprep.subr.bf16.mxu0 0
    %554 = vmatpush1.bf16.msra.mxu0 0
    %555 = vmatprep.subr.bf16.mxu0 0
    %556 = vmatpush1.bf16.msra.mxu0 0
    %557 = vmatprep.subr.bf16.mxu0 0
    %558 = vmatpush1.bf16.msra.mxu0 0
    %559 = vmatprep.subr.bf16.mxu0 0
    %560 = vmatpush1.bf16.msra.mxu0 0
    %561 = vmatprep.subr.bf16.mxu0 0
    %562 = vmatpush1.bf16.msra.mxu0 %v337
    %563 = vmatprep.subr.bf16.mxu0 0
    %564 = vmatpush1.bf16.msra.mxu0 %v336
    %565 = vmatprep.subr.bf16.mxu0 0
    %566 = vmatpush2.bf16.msra.mxu0 0
    %567 = vmatprep.subr.bf16.mxu0 0
    %568 = vmatpush2.bf16.msra.mxu0 0
    %569 = vmatprep.subr.bf16.mxu0 0
    %570 = vmatpush2.bf16.msra.mxu0 0
    %571 = vmatprep.subr.bf16.mxu0 0
    %572 = vmatpush2.bf16.msra.mxu0 0
    %573 = vmatprep.subr.bf16.mxu0 0
    %574 = vmatpush2.bf16.msra.mxu0 0
    %575 = vmatprep.subr.bf16.mxu0 0
    %576 = vmatpush2.bf16.msra.mxu0 0
    %577 = vmatprep.subr.bf16.mxu0 0
    %578 = vmatpush2.bf16.msra.mxu0 0
    %579 = vmatprep.subr.bf16.mxu0 0
    %580 = vmatpush2.bf16.msra.mxu0 0
    %581 = vmatprep.mubr.bf16.mxu0 0
    %582 = vmatmul.mubr.bf16.gmra.mxu0 %v547
    %v583 = vpop.f32.mrf.mxu0
    %v584 = vadd.f32 0.0, %v583
    %v585 = vpop.f32.mrf.mxu0
    %v586 = vpop.f32.mrf.mxu0
    %v587 = vpop.f32.mrf.mxu0
    %588 = vdwg.mxu0
    %589 = vmatprep.subr.bf16.mxu0 0
    %590 = vmatpush1.bf16.msra.mxu0 0
    %591 = vmatprep.subr.bf16.mxu0 0
    %592 = vmatpush1.bf16.msra.mxu0 0
    %593 = vmatprep.subr.bf16.mxu0 0
    %594 = vmatpush1.bf16.msra.mxu0 0
    %595 = vmatprep.subr.bf16.mxu0 0
    %596 = vmatpush1.bf16.msra.mxu0 0
    %597 = vmatprep.subr.bf16.mxu0 0
    %598 = vmatpush1.bf16.msra.mxu0 0
    %599 = vmatprep.subr.bf16.mxu0 0
    %600 = vmatpush1.bf16.msra.mxu0 0
    %601 = vmatprep.subr.bf16.mxu0 0
    %602 = vmatpush1.bf16.msra.mxu0 %v389
    %603 = vmatprep.subr.bf16.mxu0 0
    %604 = vmatpush1.bf16.msra.mxu0 %v388
    %605 = vmatprep.subr.bf16.mxu0 0
    %606 = vmatpush2.bf16.msra.mxu0 0
    %607 = vmatprep.subr.bf16.mxu0 0
    %608 = vmatpush2.bf16.msra.mxu0 0
    %609 = vmatprep.subr.bf16.mxu0 0
    %610 = vmatpush2.bf16.msra.mxu0 0
    %611 = vmatprep.subr.bf16.mxu0 0
    %612 = vmatpush2.bf16.msra.mxu0 0
    %613 = vmatprep.subr.bf16.mxu0 0
    %614 = vmatpush2.bf16.msra.mxu0 0
    %615 = vmatprep.subr.bf16.mxu0 0
    %616 = vmatpush2.bf16.msra.mxu0 0
    %617 = vmatprep.subr.bf16.mxu0 0
    %618 = vmatpush2.bf16.msra.mxu0 0
    %619 = vmatprep.subr.bf16.mxu0 0
    %620 = vmatpush2.bf16.msra.mxu0 0
    %621 = vmatprep.mubr.bf16.mxu0 0
    %622 = vmatmul.mubr.bf16.gmra.mxu0 %v469
    %v623 = vpop.f32.mrf.mxu0
    %v624 = vadd.f32 %v584, %v623
    %v625 = vpop.f32.mrf.mxu0
    %v626 = vpop.f32.mrf.mxu0
    %v627 = vpop.f32.mrf.mxu0
    %628 = vdwg.mxu0
    %v629 = vadd.f32 %v624, %v436
    %v630 = vxor.u32 %v629, 2147483648
    %v631 = vmul.f32 %v630, 1.442695
    %v632 = vpow.pop %v631
    %v633 = vadd.f32 %v632, 1.0
    %v634 = vrcp.pop %v633
    %v635 = vmul.f32 1.0, %v634
    %v636 = vtanh.pop %v629
    %v637 = vmul.f32 %v635, %v456
    %639 = vrot.lane.b32.xlu0 %v636, 64
    %v640 = vpop.permute.xlu0 %639
    %v642 = vmul.f32 %v635, %v640
    %644 = vrot.lane.b32.xlu0 %v642, 32
    %v645 = vpop.permute.xlu0 %644
    %v647 = vadd.f32 %v637, %v645
    %v648 = vtanh.pop %v647
    %650 = vrot.lane.b32.xlu0 %v648, 64
    %v651 = vpop.permute.xlu0 %650
    %v653 = vmul.f32 %v635, %v651
    %v654 = vpack.c.bf16 %v541, %v541
    %v656 = vrot.slane %v654, 2
    %657 = vrot.lane.b32.xlu0 %v656, 32
    %v658 = vpop.permute.xlu0 %657
    %v660 = vsel %vm181, %v658, 0
    %662 = vmatprep.subr.bf16.mxu0 0
    %663 = vmatpush1.bf16.msra.mxu0 0
    %664 = vmatprep.subr.bf16.mxu0 0
    %665 = vmatpush1.bf16.msra.mxu0 0
    %666 = vmatprep.subr.bf16.mxu0 0
    %667 = vmatpush1.bf16.msra.mxu0 0
    %668 = vmatprep.subr.bf16.mxu0 0
    %669 = vmatpush1.bf16.msra.mxu0 0
    %670 = vmatprep.subr.bf16.mxu0 0
    %671 = vmatpush1.bf16.msra.mxu0 0
    %672 = vmatprep.subr.bf16.mxu0 0
    %673 = vmatpush1.bf16.msra.mxu0 0
    %674 = vmatprep.subr.bf16.mxu0 0
    %675 = vmatpush1.bf16.msra.mxu0 %v178
    %676 = vmatprep.subr.bf16.mxu0 0
    %677 = vmatpush1.bf16.msra.mxu0 %v177
    %678 = vmatprep.subr.bf16.mxu0 0
    %679 = vmatpush2.bf16.msra.mxu0 0
    %680 = vmatprep.subr.bf16.mxu0 0
    %681 = vmatpush2.bf16.msra.mxu0 0
    %682 = vmatprep.subr.bf16.mxu0 0
    %683 = vmatpush2.bf16.msra.mxu0 0
    %684 = vmatprep.subr.bf16.mxu0 0
    %685 = vmatpush2.bf16.msra.mxu0 0
    %686 = vmatprep.subr.bf16.mxu0 0
    %687 = vmatpush2.bf16.msra.mxu0 0
    %688 = vmatprep.subr.bf16.mxu0 0
    %689 = vmatpush2.bf16.msra.mxu0 0
    %690 = vmatprep.subr.bf16.mxu0 0
    %691 = vmatpush2.bf16.msra.mxu0 0
    %692 = vmatprep.subr.bf16.mxu0 0
    %693 = vmatpush2.bf16.msra.mxu0 0
    %694 = vmatprep.mubr.bf16.mxu0 0
    %695 = vmatmul.mubr.bf16.gmra.mxu0 %v660
    %v696 = vpop.f32.mrf.mxu0
    %v697 = vadd.f32 0.0, %v696
    %v698 = vpop.f32.mrf.mxu0
    %v699 = vpop.f32.mrf.mxu0
    %v700 = vpop.f32.mrf.mxu0
    %701 = vdwg.mxu0
    %v703 = vrot.slane %v697, 2
    %v705 = vadd.f32 %v163, %v703
    %v706 = vxor.u32 %v705, 2147483648
    %v707 = vmul.f32 %v706, 1.442695
    %v708 = vpow.pop %v707
    %v709 = vadd.f32 %v708, 1.0
    %v710 = vrcp.pop %v709
    %v711 = vmul.f32 1.0, %v710
    %v712 = vtanh.pop %v705
    %v714 = vrot.slane %v535, 6
    %v716 = vmul.f32 %v711, %v714
    %718 = vrot.lane.b32.xlu0 %v712, 64
    %v719 = vpop.permute.xlu0 %718
    %v721 = vmul.f32 %v711, %v719
    %723 = vrot.lane.b32.xlu0 %v721, 32
    %v724 = vpop.permute.xlu0 %723
    %v726 = vadd.f32 %v716, %v724
    %v727 = vtanh.pop %v726
    %729 = vrot.lane.b32.xlu0 %v727, 64
    %v730 = vpop.permute.xlu0 %729
    %v732 = vmul.f32 %v711, %v730
    %v733 = vpack.c.bf16 %v653, %v653
    %735 = vrot.lane.b32.xlu0 %v733, 32
    %v736 = vpop.permute.xlu0 %735
    %v738 = vsel %vm181, %v736, 0
    %740 = vmatprep.subr.bf16.mxu0 0
    %741 = vmatpush1.bf16.msra.mxu0 0
    %742 = vmatprep.subr.bf16.mxu0 0
    %743 = vmatpush1.bf16.msra.mxu0 0
    %744 = vmatprep.subr.bf16.mxu0 0
    %745 = vmatpush1.bf16.msra.mxu0 0
    %746 = vmatprep.subr.bf16.mxu0 0
    %747 = vmatpush1.bf16.msra.mxu0 0
    %748 = vmatprep.subr.bf16.mxu0 0
    %749 = vmatpush1.bf16.msra.mxu0 0
    %750 = vmatprep.subr.bf16.mxu0 0
    %751 = vmatpush1.bf16.msra.mxu0 0
    %752 = vmatprep.subr.bf16.mxu0 0
    %753 = vmatpush1.bf16.msra.mxu0 %v337
    %754 = vmatprep.subr.bf16.mxu0 0
    %755 = vmatpush1.bf16.msra.mxu0 %v336
    %756 = vmatprep.subr.bf16.mxu0 0
    %757 = vmatpush2.bf16.msra.mxu0 0
    %758 = vmatprep.subr.bf16.mxu0 0
    %759 = vmatpush2.bf16.msra.mxu0 0
    %760 = vmatprep.subr.bf16.mxu0 0
    %761 = vmatpush2.bf16.msra.mxu0 0
    %762 = vmatprep.subr.bf16.mxu0 0
    %763 = vmatpush2.bf16.msra.mxu0 0
    %764 = vmatprep.subr.bf16.mxu0 0
    %765 = vmatpush2.bf16.msra.mxu0 0
    %766 = vmatprep.subr.bf16.mxu0 0
    %767 = vmatpush2.bf16.msra.mxu0 0
    %768 = vmatprep.subr.bf16.mxu0 0
    %769 = vmatpush2.bf16.msra.mxu0 0
    %770 = vmatprep.subr.bf16.mxu0 0
    %771 = vmatpush2.bf16.msra.mxu0 0
    %772 = vmatprep.mubr.bf16.mxu0 0
    %773 = vmatmul.mubr.bf16.gmra.mxu0 %v738
    %v774 = vpop.f32.mrf.mxu0
    %v775 = vadd.f32 0.0, %v774
    %v776 = vpop.f32.mrf.mxu0
    %v777 = vpop.f32.mrf.mxu0
    %v778 = vpop.f32.mrf.mxu0
    %779 = vdwg.mxu0
    %780 = vmatprep.subr.bf16.mxu0 0
    %781 = vmatpush1.bf16.msra.mxu0 0
    %782 = vmatprep.subr.bf16.mxu0 0
    %783 = vmatpush1.bf16.msra.mxu0 0
    %784 = vmatprep.subr.bf16.mxu0 0
    %785 = vmatpush1.bf16.msra.mxu0 0
    %786 = vmatprep.subr.bf16.mxu0 0
    %787 = vmatpush1.bf16.msra.mxu0 0
    %788 = vmatprep.subr.bf16.mxu0 0
    %789 = vmatpush1.bf16.msra.mxu0 0
    %790 = vmatprep.subr.bf16.mxu0 0
    %791 = vmatpush1.bf16.msra.mxu0 0
    %792 = vmatprep.subr.bf16.mxu0 0
    %793 = vmatpush1.bf16.msra.mxu0 %v389
    %794 = vmatprep.subr.bf16.mxu0 0
    %795 = vmatpush1.bf16.msra.mxu0 %v388
    %796 = vmatprep.subr.bf16.mxu0 0
    %797 = vmatpush2.bf16.msra.mxu0 0
    %798 = vmatprep.subr.bf16.mxu0 0
    %799 = vmatpush2.bf16.msra.mxu0 0
    %800 = vmatprep.subr.bf16.mxu0 0
    %801 = vmatpush2.bf16.msra.mxu0 0
    %802 = vmatprep.subr.bf16.mxu0 0
    %803 = vmatpush2.bf16.msra.mxu0 0
    %804 = vmatprep.subr.bf16.mxu0 0
    %805 = vmatpush2.bf16.msra.mxu0 0
    %806 = vmatprep.subr.bf16.mxu0 0
    %807 = vmatpush2.bf16.msra.mxu0 0
    %808 = vmatprep.subr.bf16.mxu0 0
    %809 = vmatpush2.bf16.msra.mxu0 0
    %810 = vmatprep.subr.bf16.mxu0 0
    %811 = vmatpush2.bf16.msra.mxu0 0
    %812 = vmatprep.mubr.bf16.mxu0 0
    %813 = vmatmul.mubr.bf16.gmra.mxu0 %v660
    %v814 = vpop.f32.mrf.mxu0
    %v815 = vadd.f32 %v775, %v814
    %v816 = vpop.f32.mrf.mxu0
    %v817 = vpop.f32.mrf.mxu0
    %v818 = vpop.f32.mrf.mxu0
    %819 = vdwg.mxu0
    %v820 = vadd.f32 %v815, %v436
    %v821 = vxor.u32 %v820, 2147483648
    %v822 = vmul.f32 %v821, 1.442695
    %v823 = vpow.pop %v822
    %v824 = vadd.f32 %v823, 1.0
    %v825 = vrcp.pop %v824
    %v826 = vmul.f32 1.0, %v825
    %v827 = vtanh.pop %v820
    %v828 = vmul.f32 %v826, %v647
    %830 = vrot.lane.b32.xlu0 %v827, 64
    %v831 = vpop.permute.xlu0 %830
    %v833 = vmul.f32 %v826, %v831
    %835 = vrot.lane.b32.xlu0 %v833, 32
    %v836 = vpop.permute.xlu0 %835
    %v838 = vadd.f32 %v828, %v836
    %v839 = vtanh.pop %v838
    %841 = vrot.lane.b32.xlu0 %v839, 64
    %v842 = vpop.permute.xlu0 %841
    %v844 = vmul.f32 %v826, %v842
    %v845 = vpack.c.bf16 %v732, %v732
    %v847 = vrot.slane %v845, 3
    %848 = vrot.lane.b32.xlu0 %v847, 32
    %v849 = vpop.permute.xlu0 %848
    %v851 = vsel %vm181, %v849, 0
    %853 = vmatprep.subr.bf16.mxu0 0
    %854 = vmatpush1.bf16.msra.mxu0 0
    %855 = vmatprep.subr.bf16.mxu0 0
    %856 = vmatpush1.bf16.msra.mxu0 0
    %857 = vmatprep.subr.bf16.mxu0 0
    %858 = vmatpush1.bf16.msra.mxu0 0
    %859 = vmatprep.subr.bf16.mxu0 0
    %860 = vmatpush1.bf16.msra.mxu0 0
    %861 = vmatprep.subr.bf16.mxu0 0
    %862 = vmatpush1.bf16.msra.mxu0 0
    %863 = vmatprep.subr.bf16.mxu0 0
    %864 = vmatpush1.bf16.msra.mxu0 0
    %865 = vmatprep.subr.bf16.mxu0 0
    %866 = vmatpush1.bf16.msra.mxu0 %v178
    %867 = vmatprep.subr.bf16.mxu0 0
    %868 = vmatpush1.bf16.msra.mxu0 %v177
    %869 = vmatprep.subr.bf16.mxu0 0
    %870 = vmatpush2.bf16.msra.mxu0 0
    %871 = vmatprep.subr.bf16.mxu0 0
    %872 = vmatpush2.bf16.msra.mxu0 0
    %873 = vmatprep.subr.bf16.mxu0 0
    %874 = vmatpush2.bf16.msra.mxu0 0
    %875 = vmatprep.subr.bf16.mxu0 0
    %876 = vmatpush2.bf16.msra.mxu0 0
    %877 = vmatprep.subr.bf16.mxu0 0
    %878 = vmatpush2.bf16.msra.mxu0 0
    %879 = vmatprep.subr.bf16.mxu0 0
    %880 = vmatpush2.bf16.msra.mxu0 0
    %881 = vmatprep.subr.bf16.mxu0 0
    %882 = vmatpush2.bf16.msra.mxu0 0
    %883 = vmatprep.subr.bf16.mxu0 0
    %884 = vmatpush2.bf16.msra.mxu0 0
    %885 = vmatprep.mubr.bf16.mxu0 0
    %886 = vmatmul.mubr.bf16.gmra.mxu0 %v851
    %v887 = vpop.f32.mrf.mxu0
    %v888 = vadd.f32 0.0, %v887
    %v889 = vpop.f32.mrf.mxu0
    %v890 = vpop.f32.mrf.mxu0
    %v891 = vpop.f32.mrf.mxu0
    %892 = vdwg.mxu0
    %v893 = vadd.f32 %v166, %v888
    %v894 = vxor.u32 %v893, 2147483648
    %v895 = vmul.f32 %v894, 1.442695
    %v896 = vpow.pop %v895
    %v897 = vadd.f32 %v896, 1.0
    %v898 = vrcp.pop %v897
    %v899 = vmul.f32 1.0, %v898
    %v900 = vtanh.pop %v893
    %v902 = vrot.slane %v726, 6
    %v904 = vmul.f32 %v899, %v902
    %906 = vrot.lane.b32.xlu0 %v900, 64
    %v907 = vpop.permute.xlu0 %906
    %v909 = vmul.f32 %v899, %v907
    %911 = vrot.lane.b32.xlu0 %v909, 32
    %v912 = vpop.permute.xlu0 %911
    %v914 = vadd.f32 %v904, %v912
    %v915 = vtanh.pop %v914
    %917 = vrot.lane.b32.xlu0 %v915, 64
    %v918 = vpop.permute.xlu0 %917
    %v920 = vmul.f32 %v899, %v918
    %v921 = vpack.c.bf16 %v844, %v844
    %923 = vrot.lane.b32.xlu0 %v921, 32
    %v924 = vpop.permute.xlu0 %923
    %v926 = vsel %vm181, %v924, 0
    %928 = vmatprep.subr.bf16.mxu0 0
    %929 = vmatpush1.bf16.msra.mxu0 0
    %930 = vmatprep.subr.bf16.mxu0 0
    %931 = vmatpush1.bf16.msra.mxu0 0
    %932 = vmatprep.subr.bf16.mxu0 0
    %933 = vmatpush1.bf16.msra.mxu0 0
    %934 = vmatprep.subr.bf16.mxu0 0
    %935 = vmatpush1.bf16.msra.mxu0 0
    %936 = vmatprep.subr.bf16.mxu0 0
    %937 = vmatpush1.bf16.msra.mxu0 0
    %938 = vmatprep.subr.bf16.mxu0 0
    %939 = vmatpush1.bf16.msra.mxu0 0
    %940 = vmatprep.subr.bf16.mxu0 0
    %941 = vmatpush1.bf16.msra.mxu0 %v337
    %942 = vmatprep.subr.bf16.mxu0 0
    %943 = vmatpush1.bf16.msra.mxu0 %v336
    %944 = vmatprep.subr.bf16.mxu0 0
    %945 = vmatpush2.bf16.msra.mxu0 0
    %946 = vmatprep.subr.bf16.mxu0 0
    %947 = vmatpush2.bf16.msra.mxu0 0
    %948 = vmatprep.subr.bf16.mxu0 0
    %949 = vmatpush2.bf16.msra.mxu0 0
    %950 = vmatprep.subr.bf16.mxu0 0
    %951 = vmatpush2.bf16.msra.mxu0 0
    %952 = vmatprep.subr.bf16.mxu0 0
    %953 = vmatpush2.bf16.msra.mxu0 0
    %954 = vmatprep.subr.bf16.mxu0 0
    %955 = vmatpush2.bf16.msra.mxu0 0
    %956 = vmatprep.subr.bf16.mxu0 0
    %957 = vmatpush2.bf16.msra.mxu0 0
    %958 = vmatprep.subr.bf16.mxu0 0
    %959 = vmatpush2.bf16.msra.mxu0 0
    %960 = vmatprep.mubr.bf16.mxu0 0
    %961 = vmatmul.mubr.bf16.gmra.mxu0 %v926
    %v962 = vpop.f32.mrf.mxu0
    %v963 = vadd.f32 0.0, %v962
    %v964 = vpop.f32.mrf.mxu0
    %v965 = vpop.f32.mrf.mxu0
    %v966 = vpop.f32.mrf.mxu0
    %967 = vdwg.mxu0
    %968 = vmatprep.subr.bf16.mxu0 0
    %969 = vmatpush1.bf16.msra.mxu0 0
    %970 = vmatprep.subr.bf16.mxu0 0
    %971 = vmatpush1.bf16.msra.mxu0 0
    %972 = vmatprep.subr.bf16.mxu0 0
    %973 = vmatpush1.bf16.msra.mxu0 0
    %974 = vmatprep.subr.bf16.mxu0 0
    %975 = vmatpush1.bf16.msra.mxu0 0
    %976 = vmatprep.subr.bf16.mxu0 0
    %977 = vmatpush1.bf16.msra.mxu0 0
    %978 = vmatprep.subr.bf16.mxu0 0
    %979 = vmatpush1.bf16.msra.mxu0 0
    %980 = vmatprep.subr.bf16.mxu0 0
    %981 = vmatpush1.bf16.msra.mxu0 %v389
    %982 = vmatprep.subr.bf16.mxu0 0
    %983 = vmatpush1.bf16.msra.mxu0 %v388
    %984 = vmatprep.subr.bf16.mxu0 0
    %985 = vmatpush2.bf16.msra.mxu0 0
    %986 = vmatprep.subr.bf16.mxu0 0
    %987 = vmatpush2.bf16.msra.mxu0 0
    %988 = vmatprep.subr.bf16.mxu0 0
    %989 = vmatpush2.bf16.msra.mxu0 0
    %990 = vmatprep.subr.bf16.mxu0 0
    %991 = vmatpush2.bf16.msra.mxu0 0
    %992 = vmatprep.subr.bf16.mxu0 0
    %993 = vmatpush2.bf16.msra.mxu0 0
    %994 = vmatprep.subr.bf16.mxu0 0
    %995 = vmatpush2.bf16.msra.mxu0 0
    %996 = vmatprep.subr.bf16.mxu0 0
    %997 = vmatpush2.bf16.msra.mxu0 0
    %998 = vmatprep.subr.bf16.mxu0 0
    %999 = vmatpush2.bf16.msra.mxu0 0
    %1000 = vmatprep.mubr.bf16.mxu0 0
    %1001 = vmatmul.mubr.bf16.gmra.mxu0 %v851
    %v1002 = vpop.f32.mrf.mxu0
    %v1003 = vadd.f32 %v963, %v1002
    %v1004 = vpop.f32.mrf.mxu0
    %v1005 = vpop.f32.mrf.mxu0
    %v1006 = vpop.f32.mrf.mxu0
    %1007 = vdwg.mxu0
    %v1008 = vadd.f32 %v1003, %v436
    %v1009 = vxor.u32 %v1008, 2147483648
    %v1010 = vmul.f32 %v1009, 1.442695
    %v1011 = vpow.pop %v1010
    %v1012 = vadd.f32 %v1011, 1.0
    %v1013 = vrcp.pop %v1012
    %v1014 = vmul.f32 1.0, %v1013
    %v1015 = vtanh.pop %v1008
    %v1016 = vmul.f32 %v1014, %v838
    %1018 = vrot.lane.b32.xlu0 %v1015, 64
    %v1019 = vpop.permute.xlu0 %1018
    %v1021 = vmul.f32 %v1014, %v1019
    %1023 = vrot.lane.b32.xlu0 %v1021, 32
    %v1024 = vpop.permute.xlu0 %1023
    %v1026 = vadd.f32 %v1016, %v1024
    %v1027 = vtanh.pop %v1026
    %1029 = vrot.lane.b32.xlu0 %v1027, 64
    %v1030 = vpop.permute.xlu0 %1029
    %v1032 = vmul.f32 %v1014, %v1030
    %v1033 = vpack.c.bf16 %v920, %v920
    %1035 = vrot.lane.b32.xlu0 %v1033, 32
    %v1036 = vpop.permute.xlu0 %1035
    %v1038 = vsel %vm181, %v1036, 0
    %1040 = vmatprep.subr.bf16.mxu0 0
    %1041 = vmatpush1.bf16.msra.mxu0 0
    %1042 = vmatprep.subr.bf16.mxu0 0
    %1043 = vmatpush1.bf16.msra.mxu0 0
    %1044 = vmatprep.subr.bf16.mxu0 0
    %1045 = vmatpush1.bf16.msra.mxu0 0
    %1046 = vmatprep.subr.bf16.mxu0 0
    %1047 = vmatpush1.bf16.msra.mxu0 0
    %1048 = vmatprep.subr.bf16.mxu0 0
    %1049 = vmatpush1.bf16.msra.mxu0 0
    %1050 = vmatprep.subr.bf16.mxu0 0
    %1051 = vmatpush1.bf16.msra.mxu0 0
    %1052 = vmatprep.subr.bf16.mxu0 0
    %1053 = vmatpush1.bf16.msra.mxu0 %v178
    %1054 = vmatprep.subr.bf16.mxu0 0
    %1055 = vmatpush1.bf16.msra.mxu0 %v177
    %1056 = vmatprep.subr.bf16.mxu0 0
    %1057 = vmatpush2.bf16.msra.mxu0 0
    %1058 = vmatprep.subr.bf16.mxu0 0
    %1059 = vmatpush2.bf16.msra.mxu0 0
    %1060 = vmatprep.subr.bf16.mxu0 0
    %1061 = vmatpush2.bf16.msra.mxu0 0
    %1062 = vmatprep.subr.bf16.mxu0 0
    %1063 = vmatpush2.bf16.msra.mxu0 0
    %1064 = vmatprep.subr.bf16.mxu0 0
    %1065 = vmatpush2.bf16.msra.mxu0 0
    %1066 = vmatprep.subr.bf16.mxu0 0
    %1067 = vmatpush2.bf16.msra.mxu0 0
    %1068 = vmatprep.subr.bf16.mxu0 0
    %1069 = vmatpush2.bf16.msra.mxu0 0
    %1070 = vmatprep.subr.bf16.mxu0 0
    %1071 = vmatpush2.bf16.msra.mxu0 0
    %1072 = vmatprep.mubr.bf16.mxu0 0
    %1073 = vmatmul.mubr.bf16.gmra.mxu0 %v1038
    %v1074 = vpop.f32.mrf.mxu0
    %v1075 = vadd.f32 0.0, %v1074
    %v1076 = vpop.f32.mrf.mxu0
    %v1077 = vpop.f32.mrf.mxu0
    %v1078 = vpop.f32.mrf.mxu0
    %1079 = vdwg.mxu0
    %v1081 = vrot.slane %v1075, 6
    %v1083 = vadd.f32 %v166, %v1081
    %v1084 = vxor.u32 %v1083, 2147483648
    %v1085 = vmul.f32 %v1084, 1.442695
    %v1086 = vpow.pop %v1085
    %v1087 = vadd.f32 %v1086, 1.0
    %v1088 = vrcp.pop %v1087
    %v1089 = vmul.f32 1.0, %v1088
    %v1090 = vtanh.pop %v1083
    %v1092 = vrot.slane %v914, 6
    %v1094 = vmul.f32 %v1089, %v1092
    %1096 = vrot.lane.b32.xlu0 %v1090, 64
    %v1097 = vpop.permute.xlu0 %1096
    %v1099 = vmul.f32 %v1089, %v1097
    %1101 = vrot.lane.b32.xlu0 %v1099, 32
    %v1102 = vpop.permute.xlu0 %1101
    %v1104 = vadd.f32 %v1094, %v1102
    %v1105 = vtanh.pop %v1104
    %1107 = vrot.lane.b32.xlu0 %v1105, 64
    %v1108 = vpop.permute.xlu0 %1107
    %v1110 = vmul.f32 %v1089, %v1108
    %v1111 = vpack.c.bf16 %v1032, %v1032
    %1113 = vrot.lane.b32.xlu0 %v1111, 32
    %v1114 = vpop.permute.xlu0 %1113
    %v1116 = vsel %vm181, %v1114, 0
    %1118 = vmatprep.subr.bf16.mxu0 0
    %1119 = vmatpush1.bf16.msra.mxu0 0
    %1120 = vmatprep.subr.bf16.mxu0 0
    %1121 = vmatpush1.bf16.msra.mxu0 0
    %1122 = vmatprep.subr.bf16.mxu0 0
    %1123 = vmatpush1.bf16.msra.mxu0 0
    %1124 = vmatprep.subr.bf16.mxu0 0
    %1125 = vmatpush1.bf16.msra.mxu0 0
    %1126 = vmatprep.subr.bf16.mxu0 0
    %1127 = vmatpush1.bf16.msra.mxu0 0
    %1128 = vmatprep.subr.bf16.mxu0 0
    %1129 = vmatpush1.bf16.msra.mxu0 0
    %1130 = vmatprep.subr.bf16.mxu0 0
    %1131 = vmatpush1.bf16.msra.mxu0 %v337
    %1132 = vmatprep.subr.bf16.mxu0 0
    %1133 = vmatpush1.bf16.msra.mxu0 %v336
    %1134 = vmatprep.subr.bf16.mxu0 0
    %1135 = vmatpush2.bf16.msra.mxu0 0
    %1136 = vmatprep.subr.bf16.mxu0 0
    %1137 = vmatpush2.bf16.msra.mxu0 0
    %1138 = vmatprep.subr.bf16.mxu0 0
    %1139 = vmatpush2.bf16.msra.mxu0 0
    %1140 = vmatprep.subr.bf16.mxu0 0
    %1141 = vmatpush2.bf16.msra.mxu0 0
    %1142 = vmatprep.subr.bf16.mxu0 0
    %1143 = vmatpush2.bf16.msra.mxu0 0
    %1144 = vmatprep.subr.bf16.mxu0 0
    %1145 = vmatpush2.bf16.msra.mxu0 0
    %1146 = vmatprep.subr.bf16.mxu0 0
    %1147 = vmatpush2.bf16.msra.mxu0 0
    %1148 = vmatprep.subr.bf16.mxu0 0
    %1149 = vmatpush2.bf16.msra.mxu0 0
    %1150 = vmatprep.mubr.bf16.mxu0 0
    %1151 = vmatmul.mubr.bf16.gmra.mxu0 %v1116
    %v1152 = vpop.f32.mrf.mxu0
    %v1153 = vadd.f32 0.0, %v1152
    %v1154 = vpop.f32.mrf.mxu0
    %v1155 = vpop.f32.mrf.mxu0
    %v1156 = vpop.f32.mrf.mxu0
    %1157 = vdwg.mxu0
    %1158 = vmatprep.subr.bf16.mxu0 0
    %1159 = vmatpush1.bf16.msra.mxu0 0
    %1160 = vmatprep.subr.bf16.mxu0 0
    %1161 = vmatpush1.bf16.msra.mxu0 0
    %1162 = vmatprep.subr.bf16.mxu0 0
    %1163 = vmatpush1.bf16.msra.mxu0 0
    %1164 = vmatprep.subr.bf16.mxu0 0
    %1165 = vmatpush1.bf16.msra.mxu0 0
    %1166 = vmatprep.subr.bf16.mxu0 0
    %1167 = vmatpush1.bf16.msra.mxu0 0
    %1168 = vmatprep.subr.bf16.mxu0 0
    %1169 = vmatpush1.bf16.msra.mxu0 0
    %1170 = vmatprep.subr.bf16.mxu0 0
    %1171 = vmatpush1.bf16.msra.mxu0 %v389
    %1172 = vmatprep.subr.bf16.mxu0 0
    %1173 = vmatpush1.bf16.msra.mxu0 %v388
    %1174 = vmatprep.subr.bf16.mxu0 0
    %1175 = vmatpush2.bf16.msra.mxu0 0
    %1176 = vmatprep.subr.bf16.mxu0 0
    %1177 = vmatpush2.bf16.msra.mxu0 0
    %1178 = vmatprep.subr.bf16.mxu0 0
    %1179 = vmatpush2.bf16.msra.mxu0 0
    %1180 = vmatprep.subr.bf16.mxu0 0
    %1181 = vmatpush2.bf16.msra.mxu0 0
    %1182 = vmatprep.subr.bf16.mxu0 0
    %1183 = vmatpush2.bf16.msra.mxu0 0
    %1184 = vmatprep.subr.bf16.mxu0 0
    %1185 = vmatpush2.bf16.msra.mxu0 0
    %1186 = vmatprep.subr.bf16.mxu0 0
    %1187 = vmatpush2.bf16.msra.mxu0 0
    %1188 = vmatprep.subr.bf16.mxu0 0
    %1189 = vmatpush2.bf16.msra.mxu0 0
    %1190 = vmatprep.mubr.bf16.mxu0 0
    %1191 = vmatmul.mubr.bf16.gmra.mxu0 %v1038
    %v1192 = vpop.f32.mrf.mxu0
    %v1193 = vadd.f32 %v1153, %v1192
    %v1194 = vpop.f32.mrf.mxu0
    %v1195 = vpop.f32.mrf.mxu0
    %v1196 = vpop.f32.mrf.mxu0
    %1197 = vdwg.mxu0
    %v1198 = vadd.f32 %v1193, %v436
    %v1199 = vxor.u32 %v1198, 2147483648
    %v1200 = vmul.f32 %v1199, 1.442695
    %v1201 = vpow.pop %v1200
    %v1202 = vadd.f32 %v1201, 1.0
    %v1203 = vrcp.pop %v1202
    %v1204 = vmul.f32 1.0, %v1203
    %v1205 = vtanh.pop %v1198
    %v1206 = vmul.f32 %v1204, %v1026
    %1208 = vrot.lane.b32.xlu0 %v1205, 64
    %v1209 = vpop.permute.xlu0 %1208
    %v1211 = vmul.f32 %v1204, %v1209
    %1213 = vrot.lane.b32.xlu0 %v1211, 32
    %v1214 = vpop.permute.xlu0 %1213
    %v1216 = vadd.f32 %v1206, %v1214
    %v1217 = vtanh.pop %v1216
    %1219 = vrot.lane.b32.xlu0 %v1217, 64
    %v1220 = vpop.permute.xlu0 %1219
    %v1222 = vmul.f32 %v1204, %v1220
    %v1223 = vpack.c.bf16 %v1110, %v1110
    %v1225 = vrot.slane %v1223, 1
    %1226 = vrot.lane.b32.xlu0 %v1225, 32
    %v1227 = vpop.permute.xlu0 %1226
    %v1229 = vsel %vm181, %v1227, 0
    %1231 = vmatprep.subr.bf16.mxu0 0
    %1232 = vmatpush1.bf16.msra.mxu0 0
    %1233 = vmatprep.subr.bf16.mxu0 0
    %1234 = vmatpush1.bf16.msra.mxu0 0
    %1235 = vmatprep.subr.bf16.mxu0 0
    %1236 = vmatpush1.bf16.msra.mxu0 0
    %1237 = vmatprep.subr.bf16.mxu0 0
    %1238 = vmatpush1.bf16.msra.mxu0 0
    %1239 = vmatprep.subr.bf16.mxu0 0
    %1240 = vmatpush1.bf16.msra.mxu0 0
    %1241 = vmatprep.subr.bf16.mxu0 0
    %1242 = vmatpush1.bf16.msra.mxu0 0
    %1243 = vmatprep.subr.bf16.mxu0 0
    %1244 = vmatpush1.bf16.msra.mxu0 %v178
    %1245 = vmatprep.subr.bf16.mxu0 0
    %1246 = vmatpush1.bf16.msra.mxu0 %v177
    %1247 = vmatprep.subr.bf16.mxu0 0
    %1248 = vmatpush2.bf16.msra.mxu0 0
    %1249 = vmatprep.subr.bf16.mxu0 0
    %1250 = vmatpush2.bf16.msra.mxu0 0
    %1251 = vmatprep.subr.bf16.mxu0 0
    %1252 = vmatpush2.bf16.msra.mxu0 0
    %1253 = vmatprep.subr.bf16.mxu0 0
    %1254 = vmatpush2.bf16.msra.mxu0 0
    %1255 = vmatprep.subr.bf16.mxu0 0
    %1256 = vmatpush2.bf16.msra.mxu0 0
    %1257 = vmatprep.subr.bf16.mxu0 0
    %1258 = vmatpush2.bf16.msra.mxu0 0
    %1259 = vmatprep.subr.bf16.mxu0 0
    %1260 = vmatpush2.bf16.msra.mxu0 0
    %1261 = vmatprep.subr.bf16.mxu0 0
    %1262 = vmatpush2.bf16.msra.mxu0 0
    %1263 = vmatprep.mubr.bf16.mxu0 0
    %1264 = vmatmul.mubr.bf16.gmra.mxu0 %v1229
    %v1265 = vpop.f32.mrf.mxu0
    %v1266 = vadd.f32 0.0, %v1265
    %v1267 = vpop.f32.mrf.mxu0
    %v1268 = vpop.f32.mrf.mxu0
    %v1269 = vpop.f32.mrf.mxu0
    %1270 = vdwg.mxu0
    %v1272 = vrot.slane %v1266, 4
    %v1274 = vadd.f32 %v166, %v1272
    %v1275 = vxor.u32 %v1274, 2147483648
    %v1276 = vmul.f32 %v1275, 1.442695
    %v1277 = vpow.pop %v1276
    %v1278 = vadd.f32 %v1277, 1.0
    %v1279 = vrcp.pop %v1278
    %v1280 = vmul.f32 1.0, %v1279
    %v1281 = vtanh.pop %v1274
    %v1283 = vrot.slane %v1104, 6
    %v1285 = vmul.f32 %v1280, %v1283
    %1287 = vrot.lane.b32.xlu0 %v1281, 64
    %v1288 = vpop.permute.xlu0 %1287
    %v1290 = vmul.f32 %v1280, %v1288
    %1292 = vrot.lane.b32.xlu0 %v1290, 32
    %v1293 = vpop.permute.xlu0 %1292
    %v1295 = vadd.f32 %v1285, %v1293
    %v1296 = vtanh.pop %v1295
    %1298 = vrot.lane.b32.xlu0 %v1296, 64
    %v1299 = vpop.permute.xlu0 %1298
    %v1301 = vmul.f32 %v1280, %v1299
    %v1302 = vpack.c.bf16 %v1222, %v1222
    %1304 = vrot.lane.b32.xlu0 %v1302, 32
    %v1305 = vpop.permute.xlu0 %1304
    %v1307 = vsel %vm181, %v1305, 0
    %1309 = vmatprep.subr.bf16.mxu0 0
    %1310 = vmatpush1.bf16.msra.mxu0 0
    %1311 = vmatprep.subr.bf16.mxu0 0
    %1312 = vmatpush1.bf16.msra.mxu0 0
    %1313 = vmatprep.subr.bf16.mxu0 0
    %1314 = vmatpush1.bf16.msra.mxu0 0
    %1315 = vmatprep.subr.bf16.mxu0 0
    %1316 = vmatpush1.bf16.msra.mxu0 0
    %1317 = vmatprep.subr.bf16.mxu0 0
    %1318 = vmatpush1.bf16.msra.mxu0 0
    %1319 = vmatprep.subr.bf16.mxu0 0
    %1320 = vmatpush1.bf16.msra.mxu0 0
    %1321 = vmatprep.subr.bf16.mxu0 0
    %1322 = vmatpush1.bf16.msra.mxu0 %v337
    %1323 = vmatprep.subr.bf16.mxu0 0
    %1324 = vmatpush1.bf16.msra.mxu0 %v336
    %1325 = vmatprep.subr.bf16.mxu0 0
    %1326 = vmatpush2.bf16.msra.mxu0 0
    %1327 = vmatprep.subr.bf16.mxu0 0
    %1328 = vmatpush2.bf16.msra.mxu0 0
    %1329 = vmatprep.subr.bf16.mxu0 0
    %1330 = vmatpush2.bf16.msra.mxu0 0
    %1331 = vmatprep.subr.bf16.mxu0 0
    %1332 = vmatpush2.bf16.msra.mxu0 0
    %1333 = vmatprep.subr.bf16.mxu0 0
    %1334 = vmatpush2.bf16.msra.mxu0 0
    %1335 = vmatprep.subr.bf16.mxu0 0
    %1336 = vmatpush2.bf16.msra.mxu0 0
    %1337 = vmatprep.subr.bf16.mxu0 0
    %1338 = vmatpush2.bf16.msra.mxu0 0
    %1339 = vmatprep.subr.bf16.mxu0 0
    %1340 = vmatpush2.bf16.msra.mxu0 0
    %1341 = vmatprep.mubr.bf16.mxu0 0
    %1342 = vmatmul.mubr.bf16.gmra.mxu0 %v1307
    %v1343 = vpop.f32.mrf.mxu0
    %v1344 = vadd.f32 0.0, %v1343
    %v1345 = vpop.f32.mrf.mxu0
    %v1346 = vpop.f32.mrf.mxu0
    %v1347 = vpop.f32.mrf.mxu0
    %1348 = vdwg.mxu0
    %1349 = vmatprep.subr.bf16.mxu0 0
    %1350 = vmatpush1.bf16.msra.mxu0 0
    %1351 = vmatprep.subr.bf16.mxu0 0
    %1352 = vmatpush1.bf16.msra.mxu0 0
    %1353 = vmatprep.subr.bf16.mxu0 0
    %1354 = vmatpush1.bf16.msra.mxu0 0
    %1355 = vmatprep.subr.bf16.mxu0 0
    %1356 = vmatpush1.bf16.msra.mxu0 0
    %1357 = vmatprep.subr.bf16.mxu0 0
    %1358 = vmatpush1.bf16.msra.mxu0 0
    %1359 = vmatprep.subr.bf16.mxu0 0
    %1360 = vmatpush1.bf16.msra.mxu0 0
    %1361 = vmatprep.subr.bf16.mxu0 0
    %1362 = vmatpush1.bf16.msra.mxu0 %v389
    %1363 = vmatprep.subr.bf16.mxu0 0
    %1364 = vmatpush1.bf16.msra.mxu0 %v388
    %1365 = vmatprep.subr.bf16.mxu0 0
    %1366 = vmatpush2.bf16.msra.mxu0 0
    %1367 = vmatprep.subr.bf16.mxu0 0
    %1368 = vmatpush2.bf16.msra.mxu0 0
    %1369 = vmatprep.subr.bf16.mxu0 0
    %1370 = vmatpush2.bf16.msra.mxu0 0
    %1371 = vmatprep.subr.bf16.mxu0 0
    %1372 = vmatpush2.bf16.msra.mxu0 0
    %1373 = vmatprep.subr.bf16.mxu0 0
    %1374 = vmatpush2.bf16.msra.mxu0 0
    %1375 = vmatprep.subr.bf16.mxu0 0
    %1376 = vmatpush2.bf16.msra.mxu0 0
    %1377 = vmatprep.subr.bf16.mxu0 0
    %1378 = vmatpush2.bf16.msra.mxu0 0
    %1379 = vmatprep.subr.bf16.mxu0 0
    %1380 = vmatpush2.bf16.msra.mxu0 0
    %1381 = vmatprep.mubr.bf16.mxu0 0
    %1382 = vmatmul.mubr.bf16.gmra.mxu0 %v1229
    %v1383 = vpop.f32.mrf.mxu0
    %v1384 = vadd.f32 %v1344, %v1383
    %v1385 = vpop.f32.mrf.mxu0
    %v1386 = vpop.f32.mrf.mxu0
    %v1387 = vpop.f32.mrf.mxu0
    %1388 = vdwg.mxu0
    %v1389 = vadd.f32 %v1384, %v436
    %v1390 = vxor.u32 %v1389, 2147483648
    %v1391 = vmul.f32 %v1390, 1.442695
    %v1392 = vpow.pop %v1391
    %v1393 = vadd.f32 %v1392, 1.0
    %v1394 = vrcp.pop %v1393
    %v1395 = vmul.f32 1.0, %v1394
    %v1396 = vtanh.pop %v1389
    %v1397 = vmul.f32 %v1395, %v1216
    %1399 = vrot.lane.b32.xlu0 %v1396, 64
    %v1400 = vpop.permute.xlu0 %1399
    %v1402 = vmul.f32 %v1395, %v1400
    %1404 = vrot.lane.b32.xlu0 %v1402, 32
    %v1405 = vpop.permute.xlu0 %1404
    %v1407 = vadd.f32 %v1397, %v1405
    %v1408 = vtanh.pop %v1407
    %1410 = vrot.lane.b32.xlu0 %v1408, 64
    %v1411 = vpop.permute.xlu0 %1410
    %v1413 = vmul.f32 %v1395, %v1411
    %v1414 = vpack.c.bf16 %v1301, %v1301
    %v1416 = vrot.slane %v1414, 2
    %1417 = vrot.lane.b32.xlu0 %v1416, 32
    %v1418 = vpop.permute.xlu0 %1417
    %v1420 = vsel %vm181, %v1418, 0
    %1422 = vmatprep.subr.bf16.mxu0 0
    %1423 = vmatpush1.bf16.msra.mxu0 0
    %1424 = vmatprep.subr.bf16.mxu0 0
    %1425 = vmatpush1.bf16.msra.mxu0 0
    %1426 = vmatprep.subr.bf16.mxu0 0
    %1427 = vmatpush1.bf16.msra.mxu0 0
    %1428 = vmatprep.subr.bf16.mxu0 0
    %1429 = vmatpush1.bf16.msra.mxu0 0
    %1430 = vmatprep.subr.bf16.mxu0 0
    %1431 = vmatpush1.bf16.msra.mxu0 0
    %1432 = vmatprep.subr.bf16.mxu0 0
    %1433 = vmatpush1.bf16.msra.mxu0 0
    %1434 = vmatprep.subr.bf16.mxu0 0
    %1435 = vmatpush1.bf16.msra.mxu0 %v178
    %1436 = vmatprep.subr.bf16.mxu0 0
    %1437 = vmatpush1.bf16.msra.mxu0 %v177
    %1438 = vmatprep.subr.bf16.mxu0 0
    %1439 = vmatpush2.bf16.msra.mxu0 0
    %1440 = vmatprep.subr.bf16.mxu0 0
    %1441 = vmatpush2.bf16.msra.mxu0 0
    %1442 = vmatprep.subr.bf16.mxu0 0
    %1443 = vmatpush2.bf16.msra.mxu0 0
    %1444 = vmatprep.subr.bf16.mxu0 0
    %1445 = vmatpush2.bf16.msra.mxu0 0
    %1446 = vmatprep.subr.bf16.mxu0 0
    %1447 = vmatpush2.bf16.msra.mxu0 0
    %1448 = vmatprep.subr.bf16.mxu0 0
    %1449 = vmatpush2.bf16.msra.mxu0 0
    %1450 = vmatprep.subr.bf16.mxu0 0
    %1451 = vmatpush2.bf16.msra.mxu0 0
    %1452 = vmatprep.subr.bf16.mxu0 0
    %1453 = vmatpush2.bf16.msra.mxu0 0
    %1454 = vmatprep.mubr.bf16.mxu0 0
    %1455 = vmatmul.mubr.bf16.gmra.mxu0 %v1420
    %v1456 = vpop.f32.mrf.mxu0
    %v1457 = vadd.f32 0.0, %v1456
    %v1458 = vpop.f32.mrf.mxu0
    %v1459 = vpop.f32.mrf.mxu0
    %v1460 = vpop.f32.mrf.mxu0
    %1461 = vdwg.mxu0
    %v1463 = vrot.slane %v1457, 2
    %v1465 = vadd.f32 %v166, %v1463
    %v1466 = vxor.u32 %v1465, 2147483648
    %v1467 = vmul.f32 %v1466, 1.442695
    %v1468 = vpow.pop %v1467
    %v1469 = vadd.f32 %v1468, 1.0
    %v1470 = vrcp.pop %v1469
    %v1471 = vmul.f32 1.0, %v1470
    %v1472 = vtanh.pop %v1465
    %v1474 = vrot.slane %v1295, 6
    %v1476 = vmul.f32 %v1471, %v1474
    %1478 = vrot.lane.b32.xlu0 %v1472, 64
    %v1479 = vpop.permute.xlu0 %1478
    %v1481 = vmul.f32 %v1471, %v1479
    %1483 = vrot.lane.b32.xlu0 %v1481, 32
    %v1484 = vpop.permute.xlu0 %1483
    %v1486 = vadd.f32 %v1476, %v1484
    %v1487 = vtanh.pop %v1486
    %1489 = vrot.lane.b32.xlu0 %v1487, 64
    %v1490 = vpop.permute.xlu0 %1489
    %v1492 = vmul.f32 %v1471, %v1490
    %v1493 = vpack.c.bf16 %v1413, %v1413
    %1495 = vrot.lane.b32.xlu0 %v1493, 32
    %v1496 = vpop.permute.xlu0 %1495
    %v1498 = vsel %vm181, %v1496, 0
    %1500 = vmatprep.subr.bf16.mxu0 0
    %1501 = vmatpush1.bf16.msra.mxu0 0
    %1502 = vmatprep.subr.bf16.mxu0 0
    %1503 = vmatpush1.bf16.msra.mxu0 0
    %1504 = vmatprep.subr.bf16.mxu0 0
    %1505 = vmatpush1.bf16.msra.mxu0 0
    %1506 = vmatprep.subr.bf16.mxu0 0
    %1507 = vmatpush1.bf16.msra.mxu0 0
    %1508 = vmatprep.subr.bf16.mxu0 0
    %1509 = vmatpush1.bf16.msra.mxu0 0
    %1510 = vmatprep.subr.bf16.mxu0 0
    %1511 = vmatpush1.bf16.msra.mxu0 0
    %1512 = vmatprep.subr.bf16.mxu0 0
    %1513 = vmatpush1.bf16.msra.mxu0 %v337
    %1514 = vmatprep.subr.bf16.mxu0 0
    %1515 = vmatpush1.bf16.msra.mxu0 %v336
    %1516 = vmatprep.subr.bf16.mxu0 0
    %1517 = vmatpush2.bf16.msra.mxu0 0
    %1518 = vmatprep.subr.bf16.mxu0 0
    %1519 = vmatpush2.bf16.msra.mxu0 0
    %1520 = vmatprep.subr.bf16.mxu0 0
    %1521 = vmatpush2.bf16.msra.mxu0 0
    %1522 = vmatprep.subr.bf16.mxu0 0
    %1523 = vmatpush2.bf16.msra.mxu0 0
    %1524 = vmatprep.subr.bf16.mxu0 0
    %1525 = vmatpush2.bf16.msra.mxu0 0
    %1526 = vmatprep.subr.bf16.mxu0 0
    %1527 = vmatpush2.bf16.msra.mxu0 0
    %1528 = vmatprep.subr.bf16.mxu0 0
    %1529 = vmatpush2.bf16.msra.mxu0 0
    %1530 = vmatprep.subr.bf16.mxu0 0
    %1531 = vmatpush2.bf16.msra.mxu0 0
    %1532 = vmatprep.mubr.bf16.mxu0 0
    %1533 = vmatmul.mubr.bf16.gmra.mxu0 %v1498
    %v1534 = vpop.f32.mrf.mxu0
    %v1535 = vadd.f32 0.0, %v1534
    %v1536 = vpop.f32.mrf.mxu0
    %v1537 = vpop.f32.mrf.mxu0
    %v1538 = vpop.f32.mrf.mxu0
    %1539 = vdwg.mxu0
    %1540 = vmatprep.subr.bf16.mxu0 0
    %1541 = vmatpush1.bf16.msra.mxu0 0
    %1542 = vmatprep.subr.bf16.mxu0 0
    %1543 = vmatpush1.bf16.msra.mxu0 0
    %1544 = vmatprep.subr.bf16.mxu0 0
    %1545 = vmatpush1.bf16.msra.mxu0 0
    %1546 = vmatprep.subr.bf16.mxu0 0
    %1547 = vmatpush1.bf16.msra.mxu0 0
    %1548 = vmatprep.subr.bf16.mxu0 0
    %1549 = vmatpush1.bf16.msra.mxu0 0
    %1550 = vmatprep.subr.bf16.mxu0 0
    %1551 = vmatpush1.bf16.msra.mxu0 0
    %1552 = vmatprep.subr.bf16.mxu0 0
    %1553 = vmatpush1.bf16.msra.mxu0 %v389
    %1554 = vmatprep.subr.bf16.mxu0 0
    %1555 = vmatpush1.bf16.msra.mxu0 %v388
    %1556 = vmatprep.subr.bf16.mxu0 0
    %1557 = vmatpush2.bf16.msra.mxu0 0
    %1558 = vmatprep.subr.bf16.mxu0 0
    %1559 = vmatpush2.bf16.msra.mxu0 0
    %1560 = vmatprep.subr.bf16.mxu0 0
    %1561 = vmatpush2.bf16.msra.mxu0 0
    %1562 = vmatprep.subr.bf16.mxu0 0
    %1563 = vmatpush2.bf16.msra.mxu0 0
    %1564 = vmatprep.subr.bf16.mxu0 0
    %1565 = vmatpush2.bf16.msra.mxu0 0
    %1566 = vmatprep.subr.bf16.mxu0 0
    %1567 = vmatpush2.bf16.msra.mxu0 0
    %1568 = vmatprep.subr.bf16.mxu0 0
    %1569 = vmatpush2.bf16.msra.mxu0 0
    %1570 = vmatprep.subr.bf16.mxu0 0
    %1571 = vmatpush2.bf16.msra.mxu0 0
    %1572 = vmatprep.mubr.bf16.mxu0 0
    %1573 = vmatmul.mubr.bf16.gmra.mxu0 %v1420
    %v1574 = vpop.f32.mrf.mxu0
    %v1575 = vadd.f32 %v1535, %v1574
    %v1576 = vpop.f32.mrf.mxu0
    %v1577 = vpop.f32.mrf.mxu0
    %v1578 = vpop.f32.mrf.mxu0
    %1579 = vdwg.mxu0
    %v1580 = vadd.f32 %v1575, %v436
    %v1581 = vxor.u32 %v1580, 2147483648
    %v1582 = vmul.f32 %v1581, 1.442695
    %v1583 = vpow.pop %v1582
    %v1584 = vadd.f32 %v1583, 1.0
    %v1585 = vrcp.pop %v1584
    %v1586 = vmul.f32 1.0, %v1585
    %v1587 = vtanh.pop %v1580
    %v1588 = vmul.f32 %v1586, %v1407
    %1590 = vrot.lane.b32.xlu0 %v1587, 64
    %v1591 = vpop.permute.xlu0 %1590
    %v1593 = vmul.f32 %v1586, %v1591
    %1595 = vrot.lane.b32.xlu0 %v1593, 32
    %v1596 = vpop.permute.xlu0 %1595
    %v1598 = vadd.f32 %v1588, %v1596
    %v1599 = vtanh.pop %v1598
    %1601 = vrot.lane.b32.xlu0 %v1599, 64
    %v1602 = vpop.permute.xlu0 %1601
    %v1604 = vmul.f32 %v1586, %v1602
    %v1605 = vpack.c.bf16 %v1604, %v1604
    %v1606 = vpack.c.bf16 %v1492, %v1492
    %1608 = vrot.lane.b32.xlu0 %v1605, 32
    %v1609 = vpop.permute.xlu0 %1608
    %v1611 = vsel %vm181, %v1609, 0
    %1613 = vmatprep.subr.bf16.mxu0 0
    %1614 = vmatpush1.bf16.msra.mxu0 0
    %1615 = vmatprep.subr.bf16.mxu0 0
    %1616 = vmatpush1.bf16.msra.mxu0 0
    %1617 = vmatprep.subr.bf16.mxu0 0
    %1618 = vmatpush1.bf16.msra.mxu0 0
    %1619 = vmatprep.subr.bf16.mxu0 0
    %1620 = vmatpush1.bf16.msra.mxu0 0
    %1621 = vmatprep.subr.bf16.mxu0 0
    %1622 = vmatpush1.bf16.msra.mxu0 0
    %1623 = vmatprep.subr.bf16.mxu0 0
    %1624 = vmatpush1.bf16.msra.mxu0 0
    %1625 = vmatprep.subr.bf16.mxu0 0
    %1626 = vmatpush1.bf16.msra.mxu0 %v337
    %1627 = vmatprep.subr.bf16.mxu0 0
    %1628 = vmatpush1.bf16.msra.mxu0 %v336
    %1629 = vmatprep.subr.bf16.mxu0 0
    %1630 = vmatpush2.bf16.msra.mxu0 0
    %1631 = vmatprep.subr.bf16.mxu0 0
    %1632 = vmatpush2.bf16.msra.mxu0 0
    %1633 = vmatprep.subr.bf16.mxu0 0
    %1634 = vmatpush2.bf16.msra.mxu0 0
    %1635 = vmatprep.subr.bf16.mxu0 0
    %1636 = vmatpush2.bf16.msra.mxu0 0
    %1637 = vmatprep.subr.bf16.mxu0 0
    %1638 = vmatpush2.bf16.msra.mxu0 0
    %1639 = vmatprep.subr.bf16.mxu0 0
    %1640 = vmatpush2.bf16.msra.mxu0 0
    %1641 = vmatprep.subr.bf16.mxu0 0
    %1642 = vmatpush2.bf16.msra.mxu0 0
    %1643 = vmatprep.subr.bf16.mxu0 0
    %1644 = vmatpush2.bf16.msra.mxu0 0
    %1645 = vmatprep.mubr.bf16.mxu0 0
    %1646 = vmatmul.mubr.bf16.gmra.mxu0 %v1611
    %v1647 = vpop.f32.mrf.mxu0
    %v1648 = vadd.f32 0.0, %v1647
    %v1649 = vpop.f32.mrf.mxu0
    %v1650 = vpop.f32.mrf.mxu0
    %v1651 = vpop.f32.mrf.mxu0
    %1652 = vdwg.mxu0
    %v1654 = vrot.slane %v1606, 3
    %1655 = vrot.lane.b32.xlu0 %v1654, 32
    %v1656 = vpop.permute.xlu0 %1655
    %v1658 = vsel %vm181, %v1656, 0
    %1660 = vmatprep.subr.bf16.mxu0 0
    %1661 = vmatpush1.bf16.msra.mxu0 0
    %1662 = vmatprep.subr.bf16.mxu0 0
    %1663 = vmatpush1.bf16.msra.mxu0 0
    %1664 = vmatprep.subr.bf16.mxu0 0
    %1665 = vmatpush1.bf16.msra.mxu0 0
    %1666 = vmatprep.subr.bf16.mxu0 0
    %1667 = vmatpush1.bf16.msra.mxu0 0
    %1668 = vmatprep.subr.bf16.mxu0 0
    %1669 = vmatpush1.bf16.msra.mxu0 0
    %1670 = vmatprep.subr.bf16.mxu0 0
    %1671 = vmatpush1.bf16.msra.mxu0 0
    %1672 = vmatprep.subr.bf16.mxu0 0
    %1673 = vmatpush1.bf16.msra.mxu0 %v389
    %1674 = vmatprep.subr.bf16.mxu0 0
    %1675 = vmatpush1.bf16.msra.mxu0 %v388
    %1676 = vmatprep.subr.bf16.mxu0 0
    %1677 = vmatpush2.bf16.msra.mxu0 0
    %1678 = vmatprep.subr.bf16.mxu0 0
    %1679 = vmatpush2.bf16.msra.mxu0 0
    %1680 = vmatprep.subr.bf16.mxu0 0
    %1681 = vmatpush2.bf16.msra.mxu0 0
    %1682 = vmatprep.subr.bf16.mxu0 0
    %1683 = vmatpush2.bf16.msra.mxu0 0
    %1684 = vmatprep.subr.bf16.mxu0 0
    %1685 = vmatpush2.bf16.msra.mxu0 0
    %1686 = vmatprep.subr.bf16.mxu0 0
    %1687 = vmatpush2.bf16.msra.mxu0 0
    %1688 = vmatprep.subr.bf16.mxu0 0
    %1689 = vmatpush2.bf16.msra.mxu0 0
    %1690 = vmatprep.subr.bf16.mxu0 0
    %1691 = vmatpush2.bf16.msra.mxu0 0
    %1692 = vmatprep.mubr.bf16.mxu0 0
    %1693 = vmatmul.mubr.bf16.gmra.mxu0 %v1658
    %v1694 = vpop.f32.mrf.mxu0
    %v1695 = vadd.f32 %v1648, %v1694
    %v1696 = vpop.f32.mrf.mxu0
    %v1697 = vpop.f32.mrf.mxu0
    %v1698 = vpop.f32.mrf.mxu0
    %1699 = vdwg.mxu0
    %v1700 = vadd.f32 %v1695, %v436
    %v1701 = vxor.u32 %v1700, 2147483648
    %v1702 = vmul.f32 %v1701, 1.442695
    %v1703 = vpow.pop %v1702
    %v1704 = vadd.f32 %v1703, 1.0
    %v1705 = vrcp.pop %v1704
    %v1706 = vmul.f32 1.0, %v1705
    %v1707 = vtanh.pop %v1700
    %v1708 = vmul.f32 %v1706, %v1598
    %1710 = vrot.lane.b32.xlu0 %v1707, 64
    %v1711 = vpop.permute.xlu0 %1710
    %v1713 = vmul.f32 %v1706, %v1711
    %1715 = vrot.lane.b32.xlu0 %v1713, 32
    %v1716 = vpop.permute.xlu0 %1715
    %v1718 = vadd.f32 %v1708, %v1716
    %v1719 = vtanh.pop %v1718
    %1721 = vrot.lane.b32.xlu0 %v1719, 64
    %v1722 = vpop.permute.xlu0 %1721
    %v1724 = vmul.f32 %v1706, %v1722
    %v1725 = vpack.c.bf16 %v1724, %v1724
    %v1726 = vld [vmem:[%s7] sm:$0xf]
    %v1727 = vld [vmem:[%s7 + $0x4] sm:$0xf]
    %v1728 = vld [vmem:[%s7 + $0x8] sm:$0xf]
    %v1729 = vld [vmem:[%s7 + $0xc] sm:$0xf]
    %v1730 = vld [vmem:[%s8] sm:$0x1]
    %v1732 = vlaneseq
    %v1733 = vshrl.u32 %v1732, 7
    %v1734 = vsub.s32 0, %v1733
    %v1735 = vrot.slane %v1730, %v1734
    %1738 = vrot.lane.b32.xlu0 %v1725, 32
    %v1739 = vpop.permute.xlu0 %1738
    %v1744 = vunpack.c.l.b16 %v1726
    %v1745 = vunpack.c.l.b16 %v1727
    %v1746 = vunpack.c.l.b16 %v1728
    %v1747 = vunpack.c.l.b16 %v1729
    %v1748 = vpack.c.b16 %v1745, %v1744
    %v1749 = vpack.c.b16 %v1747, %v1746
    %v1753 = vsel %vm181, %v1739, 0
    %1755 = vmatprep.subr.bf16.mxu0 0
    %1756 = vmatpush1.bf16.msra.mxu0 0
    %1757 = vmatprep.subr.bf16.mxu0 0
    %1758 = vmatpush1.bf16.msra.mxu0 0
    %1759 = vmatprep.subr.bf16.mxu0 0
    %1760 = vmatpush1.bf16.msra.mxu0 0
    %1761 = vmatprep.subr.bf16.mxu0 0
    %1762 = vmatpush1.bf16.msra.mxu0 0
    %1763 = vmatprep.subr.bf16.mxu0 0
    %1764 = vmatpush1.bf16.msra.mxu0 0
    %1765 = vmatprep.subr.bf16.mxu0 0
    %1766 = vmatpush1.bf16.msra.mxu0 0
    %1767 = vmatprep.subr.bf16.mxu0 0
    %1768 = vmatpush1.bf16.msra.mxu0 %v1749
    %1769 = vmatprep.subr.bf16.mxu0 0
    %1770 = vmatpush1.bf16.msra.mxu0 %v1748
    %1771 = vmatprep.subr.bf16.mxu0 0
    %1772 = vmatpush2.bf16.msra.mxu0 0
    %1773 = vmatprep.subr.bf16.mxu0 0
    %1774 = vmatpush2.bf16.msra.mxu0 0
    %1775 = vmatprep.subr.bf16.mxu0 0
    %1776 = vmatpush2.bf16.msra.mxu0 0
    %1777 = vmatprep.subr.bf16.mxu0 0
    %1778 = vmatpush2.bf16.msra.mxu0 0
    %1779 = vmatprep.subr.bf16.mxu0 0
    %1780 = vmatpush2.bf16.msra.mxu0 0
    %1781 = vmatprep.subr.bf16.mxu0 0
    %1782 = vmatpush2.bf16.msra.mxu0 0
    %1783 = vmatprep.subr.bf16.mxu0 0
    %1784 = vmatpush2.bf16.msra.mxu0 0
    %1785 = vmatprep.subr.bf16.mxu0 0
    %1786 = vmatpush2.bf16.msra.mxu0 0
    %1787 = vmatprep.mubr.bf16.mxu0 0
    %1788 = vmatmul.mubr.bf16.gmra.mxu0 %v1753
    %v1789 = vpop.f32.mrf.mxu0
    %v1790 = vadd.f32 %v1735, %v1789
    %v1791 = vpop.f32.mrf.mxu0
    %v1792 = vpop.f32.mrf.mxu0
    %v1793 = vpop.f32.mrf.mxu0
    %1794 = vdwg.mxu0
    %vm1795 = vcmask 25600
    %1796 = vst.msk [vmem:[#allocation10] sm:$0x3] %vm1795, %v1790
    // Predicated region
    $region54: #{tpu_custom_call.1} parent=1 // pred_check
      _
    $region55: #{tpu_custom_call.1} parent=1 // pred_check_branch
      %1798 = sbr.rel (0) target = $region57
    $region56: #{tpu_custom_call.1} parent=1 // pred_region
      %s1800 = ssub.s32 32, 32
      %1801 = vsyncadd [#allocation4], %s1800
      %s1803 = sshll.u32 [#allocation10], 4
      %s1804 = int_to_ptr.vmem [resolvable:$true] %s1803
      %1806 = dma.vmem_to_hbm [thread:$0]  %s1804, 32, %s9, [#allocation4]
    $region57: #{tpu_custom_call.1} parent=1 // pred_fallthru
      _
    // Predicated region
    $region58: #{tpu_custom_call.1} parent=1 // pred_check
      _
    $region59: #{tpu_custom_call.1} parent=1 // pred_check_branch
      %1808 = sbr.rel (0) target = $region61
    $region60: #{tpu_custom_call.1} parent=1 // pred_region
      %1809 = dma.done [#allocation4], 32
    $region61: #{tpu_custom_call.1} parent=1 // pred_fallthru
      _
    %1810 = vsyncpa [#allocation3], 1
    %1811 = vsyncpa [#allocation6], 1
    %1812 = vsyncpa [#allocation9], 1
    %1813 = vsyncpa [#allocation4], 1

</llo_original>
